<compile_context>
chip_gen: v6e
topology: v6e:2x2x1
jax: 0.10.0
libtpu: 0.0.40
codegen_flags: <defaults>
</compile_context>

<pallas_src>
import functools

import jax
import jax.numpy as jnp
from jax import lax
from jax.experimental import pallas as pl
from jax.experimental.pallas import tpu as pltpu


# ----------------------------------------------------------------------------
# Per-layer kernel body (grid axis 0 = layer index)
# ----------------------------------------------------------------------------

def _encoder_layer_kernel(
    x_ref,                      # (B*S, D)   batch-major rows (read on layer 0)
    wqkv_ref, bqkv_ref,         # (1, D, 3D) bf16, (1, 1, 3D) f32
    wo_ref, bo_ref,             # (1, D, D)  bf16, (1, 1, D)  f32
    ln1g_ref, ln1b_ref,         # (1, 1, D)  f32
    w1_ref, b1_ref,             # (1, D, FF) bf16, (1, 1, FF) f32
    w2_ref, b2_ref,             # (1, FF, D) bf16, (1, 1, D)  f32
    ln2g_ref, ln2b_ref,         # (1, 1, D)  f32
    o_ref,                      # (B*S, D)
    x_sc,                       # VMEM (B*S, D)  f32  — residual stream
    qkv_sc,                     # VMEM (B*S, 3D) f32  — fused QKV activations
    ctx_sc,                     # VMEM (B*S, D)  f32  — attention context
    *, seq, batch, nheads, eps):
  f32 = jnp.float32
  bf16 = jnp.bfloat16
  bs, d = x_sc.shape
  dh = d // nheads
  scale = 1.0 / float(dh) ** 0.5

  l = pl.program_id(0)

  @pl.when(l == 0)
  def _():
    x_sc[...] = x_ref[...].astype(f32)

  def layer_norm(z, g, b):
    mu = jnp.mean(z, axis=-1, keepdims=True)
    var = jnp.mean((z - mu) * (z - mu), axis=-1, keepdims=True)
    return (z - mu) * lax.rsqrt(var + eps) * g + b

  x = x_sc[...]                                     # (B*S, D) f32

  # ---------------- self-attention ----------------
  # Fused QKV projection: one lane-dense (B*S, D) x (D, 3D) matmul.
  qkv_sc[...] = (jnp.dot(x.astype(bf16), wqkv_ref[0],
                         preferred_element_type=f32) + bqkv_ref[0])

  # Per-batch attention: (S, S) scores only, no cross-batch mask needed.
  def attn_one_batch(b, carry):
    start = b * seq
    if seq % 8 == 0:
      start = pl.multiple_of(start, 8)              # sublane-aligned row window
    rows = pl.ds(start, seq)
    q_b = qkv_sc[rows, pl.ds(0 * d, d)]             # (S, D) f32
    k_b = qkv_sc[rows, pl.ds(1 * d, d)]
    v_b = qkv_sc[rows, pl.ds(2 * d, d)]
    for h in range(nheads):
      cols = slice(h * dh, (h + 1) * dh)
      qh = q_b[:, cols].astype(bf16)                # (S, Dh)
      kh = k_b[:, cols].astype(bf16)
      vh = v_b[:, cols].astype(bf16)
      # scores = q @ k^T (transposed contraction, no explicit .T), f32 softmax
      s = lax.dot_general(qh, kh, (((1,), (1,)), ((), ())),
                          preferred_element_type=f32) * scale
      m = jnp.max(s, axis=-1, keepdims=True)
      p = jnp.exp(s - m)
      p = p * pl.reciprocal(jnp.sum(p, axis=-1, keepdims=True), approx=True)
      o_h = jnp.dot(p.astype(bf16), vh, preferred_element_type=f32)  # (S, Dh)
      # write this head's context into its lane columns of the context scratch
      ctx_sc[rows, pl.ds(h * dh, dh)] = o_h
    return carry

  lax.fori_loop(0, batch, attn_one_batch, 0, unroll=True)

  # Folded out_proj: single lane-dense (B*S, D) x (D, D) matmul.
  attn = (jnp.dot(ctx_sc[...].astype(bf16), wo_ref[0],
                  preferred_element_type=f32) + bo_ref[0])
  x1 = layer_norm(x + attn, ln1g_ref[0], ln1b_ref[0])

  # ---------------- feed-forward ----------------
  hid = (jnp.dot(x1.astype(bf16), w1_ref[0],
                 preferred_element_type=f32) + b1_ref[0])
  hid = jnp.maximum(hid, 0.0)
  ff = (jnp.dot(hid.astype(bf16), w2_ref[0],
                preferred_element_type=f32) + b2_ref[0])
  x_out = layer_norm(x1 + ff, ln2g_ref[0], ln2b_ref[0])

  x_sc[...] = x_out                                  # carry residual stream
  o_ref[...] = x_out.astype(o_ref.dtype)             # last step's value persists


# ----------------------------------------------------------------------------
# Host-side glue: stack per-layer weights (bf16), layout shuffle, pallas_call
# ----------------------------------------------------------------------------

def _prep_stacked_params(layer_params):
  bf16 = jnp.bfloat16
  f32 = jnp.float32
  return dict(
      wqkv=jnp.stack([p["in_proj_w"] for p in layer_params]).astype(bf16),
      bqkv=jnp.stack([p["in_proj_b"].reshape(1, -1)
                      for p in layer_params]).astype(f32),
      wo=jnp.stack([p["out_proj_w"] for p in layer_params]).astype(bf16),
      bo=jnp.stack([p["out_proj_b"].reshape(1, -1)
                    for p in layer_params]).astype(f32),
      ln1g=jnp.stack([p["ln1_g"].reshape(1, -1)
                      for p in layer_params]).astype(f32),
      ln1b=jnp.stack([p["ln1_b"].reshape(1, -1)
                      for p in layer_params]).astype(f32),
      w1=jnp.stack([p["ff1_w"] for p in layer_params]).astype(bf16),
      b1=jnp.stack([p["ff1_b"].reshape(1, -1)
                    for p in layer_params]).astype(f32),
      w2=jnp.stack([p["ff2_w"] for p in layer_params]).astype(bf16),
      b2=jnp.stack([p["ff2_b"].reshape(1, -1)
                    for p in layer_params]).astype(f32),
      ln2g=jnp.stack([p["ln2_g"].reshape(1, -1)
                      for p in layer_params]).astype(f32),
      ln2b=jnp.stack([p["ln2_b"].reshape(1, -1)
                      for p in layer_params]).astype(f32),
  )


def transformer_encoder(x, layer_params, nheads):
  # x: (S, B, D) — PyTorch nn.TransformerEncoder default (batch_first=False).
  S, B, D = x.shape
  L = len(layer_params)
  FF = layer_params[0]["ff1_w"].shape[1]
  bsz = B * S

  sp = _prep_stacked_params(layer_params)

  # batch-major rows: (B*S, D) so per-batch attention is a row-window slice
  xb = jnp.transpose(x, (1, 0, 2)).reshape(bsz, D)

  def per_layer_spec(shape):
    blk = (1,) + tuple(int(s) for s in shape[1:])
    rest = len(shape) - 1
    return pl.BlockSpec(blk, lambda l, _r=rest: (l,) + (0,) * _r)

  args = (xb,
          sp["wqkv"], sp["bqkv"], sp["wo"], sp["bo"],
          sp["ln1g"], sp["ln1b"],
          sp["w1"], sp["b1"], sp["w2"], sp["b2"],
          sp["ln2g"], sp["ln2b"])
  in_specs = ([pl.BlockSpec((bsz, D), lambda l: (0, 0))] +
              [per_layer_spec(a.shape) for a in args[1:]])

  scratch_shapes = [
      pltpu.VMEM((bsz, D), jnp.float32),       # residual stream
      pltpu.VMEM((bsz, 3 * D), jnp.float32),   # fused QKV
      pltpu.VMEM((bsz, D), jnp.float32),       # attention context
  ]

  # VMEM budget: double-buffered per-layer weights + resident scratch + I/O,
  # with 2x margin, clamped to [16 MiB, 64 MiB] (fits v7x's 64 MiB physical).
  per_layer_w = 2 * (3 * D * D + D * D + 2 * D * FF)      # bf16 weight bytes
  per_layer_p = 4 * (3 * D + 6 * D + FF)                  # f32 bias / LN bytes
  scratch_b = 4 * (2 * bsz * D + bsz * 3 * D)
  io_b = 4 * (3 * bsz * D)                                # x (2-buf) + output
  vmem_limit = 2 * (2 * (per_layer_w + per_layer_p) + scratch_b + io_b)
  vmem_limit = int(min(64 * 1024 * 1024, max(16 * 1024 * 1024, vmem_limit)))

  kernel = functools.partial(_encoder_layer_kernel, seq=S, batch=B,
                             nheads=nheads, eps=1e-5)
  out = pl.pallas_call(
      kernel,
      out_shape=jax.ShapeDtypeStruct((bsz, D), x.dtype),
      grid=(L,),
      in_specs=in_specs,
      out_specs=pl.BlockSpec((bsz, D), lambda l: (0, 0)),
      scratch_shapes=scratch_shapes,
      compiler_params=pltpu.CompilerParams(
          dimension_semantics=("arbitrary",),
          vmem_limit_bytes=vmem_limit),
  )(*args)

  return jnp.transpose(out.reshape(B, S, D), (1, 0, 2))


transformer_encoder_jit = jax.jit(transformer_encoder, static_argnums=(2,))


# ----------------------------------------------------------------------------
# Pure-JAX reference (f32) for a tolerance check
# ----------------------------------------------------------------------------

def reference_encoder(x, layer_params, nheads):
  S, B, D = x.shape
  H = nheads
  Dh = D // H

  def ln(z, g, b):
    mu = z.mean(-1, keepdims=True)
    var = ((z - mu) ** 2).mean(-1, keepdims=True)
    return (z - mu) / jnp.sqrt(var + 1e-5) * g + b

  for p in layer_params:
    xf = x.reshape(S * B, D)
    qkv = xf @ p["in_proj_w"] + p["in_proj_b"]
    q, k, v = jnp.split(qkv, 3, axis=-1)

    def heads(t):
      return jnp.transpose(t.reshape(S, B, H, Dh), (1, 2, 0, 3))  # (B,H,S,Dh)

    qh, kh, vh = heads(q), heads(k), heads(v)
    s = jnp.einsum("bhqd,bhkd->bhqk", qh, kh) / jnp.sqrt(jnp.float32(Dh))
    pm = jax.nn.softmax(s, axis=-1)
    o = jnp.einsum("bhqk,bhkd->bhqd", pm, vh)
    a = jnp.transpose(o, (2, 0, 1, 3)).reshape(S * B, D)
    attn_out = a @ p["out_proj_w"] + p["out_proj_b"]
    x1 = ln(xf + attn_out, p["ln1_g"], p["ln1_b"])
    h = jnp.maximum(x1 @ p["ff1_w"] + p["ff1_b"], 0.0)
    ff = h @ p["ff2_w"] + p["ff2_b"]
    x = ln(x1 + ff, p["ln2_g"], p["ln2_b"]).reshape(S, B, D)
  return x


# ----------------------------------------------------------------------------
# Deterministic parameter init (shapes from nn.TransformerEncoderLayer)
# ----------------------------------------------------------------------------

def init_layer_params(key, d_model, ff_dim):
  ks = jax.random.split(key, 8)
  s_in = 1.0 / float(d_model) ** 0.5
  s_ff = 1.0 / float(ff_dim) ** 0.5
  return {
      # stored pre-transposed: y = x @ W + b
      "in_proj_w": jax.random.uniform(ks[0], (d_model, 3 * d_model),
                                      jnp.float32, -s_in, s_in),
      "in_proj_b": jax.random.uniform(ks[1], (3 * d_model,),
                                      jnp.float32, -s_in, s_in),
      "out_proj_w": jax.random.uniform(ks[2], (d_model, d_model),
                                       jnp.float32, -s_in, s_in),
      "out_proj_b": jax.random.uniform(ks[3], (d_model,),
                                       jnp.float32, -s_in, s_in),
      "ff1_w": jax.random.uniform(ks[4], (d_model, ff_dim),
                                  jnp.float32, -s_in, s_in),
      "ff1_b": jax.random.uniform(ks[5], (ff_dim,),
                                  jnp.float32, -s_in, s_in),
      "ff2_w": jax.random.uniform(ks[6], (ff_dim, d_model),
                                  jnp.float32, -s_ff, s_ff),
      "ff2_b": jax.random.uniform(ks[7], (d_model,),
                                  jnp.float32, -s_ff, s_ff),
      "ln1_g": jnp.ones((d_model,), jnp.float32),
      "ln1_b": jnp.zeros((d_model,), jnp.float32),
      "ln2_g": jnp.ones((d_model,), jnp.float32),
      "ln2_b": jnp.zeros((d_model,), jnp.float32),
  }


if __name__ == "__main__":
  # TransformerEncoder(inc=32, nheads=4, feedforward_dim=64, nlayers=2, dropout=0.0)
  S, B, D, H, FF, L = 8, 2, 32, 4, 64, 2

  root = jax.random.PRNGKey(0)
  kx, kp = jax.random.split(root)
  x = jax.random.normal(kx, (S, B, D), dtype=jnp.float32)

  layer_keys = jax.random.split(kp, L)
  params = [init_layer_params(k, D, FF) for k in layer_keys]

  out = transformer_encoder_jit(x, params, H)
  out = jax.block_until_ready(out)
  assert out.shape == (S, B, D)
  assert bool(jnp.all(jnp.isfinite(out)))

  ref = reference_encoder(x, params, H)
  err = float(jnp.max(jnp.abs(out - ref)))
  assert err < 1e-1, f"max abs err vs f32 reference: {err}"

  print("KERNEL_OK")
</pallas_src>

<mosaic_0001>
module attributes {stable_mosaic.version = 11 : i64} {
  func.func @_encoder_layer_kernel(%arg0: i32, %arg1: memref<16x32xf32, #tpu.memory_space<vmem>>, %arg2: memref<1x32x96xbf16, #tpu.memory_space<vmem>>, %arg3: memref<1x1x96xf32, #tpu.memory_space<vmem>>, %arg4: memref<1x32x32xbf16, #tpu.memory_space<vmem>>, %arg5: memref<1x1x32xf32, #tpu.memory_space<vmem>>, %arg6: memref<1x1x32xf32, #tpu.memory_space<vmem>>, %arg7: memref<1x1x32xf32, #tpu.memory_space<vmem>>, %arg8: memref<1x32x64xbf16, #tpu.memory_space<vmem>>, %arg9: memref<1x1x64xf32, #tpu.memory_space<vmem>>, %arg10: memref<1x64x32xbf16, #tpu.memory_space<vmem>>, %arg11: memref<1x1x32xf32, #tpu.memory_space<vmem>>, %arg12: memref<1x1x32xf32, #tpu.memory_space<vmem>>, %arg13: memref<1x1x32xf32, #tpu.memory_space<vmem>>, %arg14: memref<16x32xf32, #tpu.memory_space<vmem>>, %arg15: memref<16x32xf32, #tpu.memory_space<vmem>>, %arg16: memref<16x96xf32, #tpu.memory_space<vmem>>, %arg17: memref<16x32xf32, #tpu.memory_space<vmem>>) attributes {dimension_semantics = [#tpu.dimension_semantics<arbitrary>], iteration_bounds = array<i64: 2>, scalar_prefetch = 0 : i64, scratch_operands = 3 : i64, tpu.core_type = #tpu.core_type<tc>, window_params = [{pipeline_mode = #tpu.pipeline_mode<synchronous>, transform_indices = @transform_0, window_bounds = array<i64: 16, 32>}, {transform_indices = @transform_1, window_bounds = array<i64: 1, 32, 96>}, {transform_indices = @transform_2, window_bounds = array<i64: 1, 1, 96>}, {transform_indices = @transform_3, window_bounds = array<i64: 1, 32, 32>}, {transform_indices = @transform_4, window_bounds = array<i64: 1, 1, 32>}, {transform_indices = @transform_5, window_bounds = array<i64: 1, 1, 32>}, {transform_indices = @transform_6, window_bounds = array<i64: 1, 1, 32>}, {transform_indices = @transform_7, window_bounds = array<i64: 1, 32, 64>}, {transform_indices = @transform_8, window_bounds = array<i64: 1, 1, 64>}, {transform_indices = @transform_9, window_bounds = array<i64: 1, 64, 32>}, {transform_indices = @transform_10, window_bounds = array<i64: 1, 1, 32>}, {transform_indices = @transform_11, window_bounds = array<i64: 1, 1, 32>}, {transform_indices = @transform_12, window_bounds = array<i64: 1, 1, 32>}, {pipeline_mode = #tpu.pipeline_mode<synchronous>, transform_indices = @transform_13, window_bounds = array<i64: 16, 32>}]} {
    %c0_i32 = arith.constant 0 : i32
    %0 = arith.cmpi eq, %arg0, %c0_i32 : i32
    %1 = arith.extui %0 : i1 to i32
    %c0_i32_0 = arith.constant 0 : i32
    %2 = arith.cmpi ne, %1, %c0_i32_0 : i32
    scf.if %2 {
      %c0_111 = arith.constant 0 : index
      %c0_112 = arith.constant 0 : index
      %300 = vector.load %arg1[%c0_111, %c0_112] : memref<16x32xf32, #tpu.memory_space<vmem>>, vector<16x32xf32>
      %c0_113 = arith.constant 0 : index
      %c0_114 = arith.constant 0 : index
      %301 = vector.load %arg15[%c0_113, %c0_114] : memref<16x32xf32, #tpu.memory_space<vmem>>, vector<16x32xf32>
      tpu.vector_store %arg15[%c0_113, %c0_114], %300 {strides = array<i32>} : memref<16x32xf32, #tpu.memory_space<vmem>>, vector<16x32xf32>,
    } else {
    }
    %c0 = arith.constant 0 : index
    %c0_1 = arith.constant 0 : index
    %3 = vector.load %arg15[%c0, %c0_1] : memref<16x32xf32, #tpu.memory_space<vmem>>, vector<16x32xf32>
    %4 = arith.truncf %3 : vector<16x32xf32> to vector<16x32xbf16>
    %c0_2 = arith.constant 0 : index
    %c0_3 = arith.constant 0 : index
    %c0_4 = arith.constant 0 : index
    %5 = vector.load %arg2[%c0_2, %c0_3, %c0_4] : memref<1x32x96xbf16, #tpu.memory_space<vmem>>, vector<1x32x96xbf16>
    %6 = vector.shape_cast %5 : vector<1x32x96xbf16> to vector<32x96xbf16>
    %cst = arith.constant dense<0.000000e+00> : vector<16x96xf32>
    %7 = tpu.matmul %4, %6, %cst {dimension_numbers = #tpu.dot_dimension_numbers<[1], [0], [0], [1], [0, 0, 1, 1], [], []>} : vector<16x32xbf16>, vector<32x96xbf16>, vector<16x96xf32> -> vector<16x96xf32>
    %c0_5 = arith.constant 0 : index
    %c0_6 = arith.constant 0 : index
    %c0_7 = arith.constant 0 : index
    %8 = vector.load %arg3[%c0_5, %c0_6, %c0_7] : memref<1x1x96xf32, #tpu.memory_space<vmem>>, vector<1x1x96xf32>
    %9 = vector.shape_cast %8 : vector<1x1x96xf32> to vector<1x96xf32>
    %10 = vector.broadcast %9 : vector<1x96xf32> to vector<16x96xf32>
    %11 = arith.addf %7, %10 : vector<16x96xf32>
    %c0_8 = arith.constant 0 : index
    %c0_9 = arith.constant 0 : index
    %12 = vector.load %arg16[%c0_8, %c0_9] : memref<16x96xf32, #tpu.memory_space<vmem>>, vector<16x96xf32>
    tpu.vector_store %arg16[%c0_8, %c0_9], %11 {strides = array<i32>} : memref<16x96xf32, #tpu.memory_space<vmem>>, vector<16x96xf32>,
    %c0_i32_10 = arith.constant 0 : i32
    %c8_i32 = arith.constant 8 : i32
    %13 = arith.muli %c0_i32_10, %c8_i32 : i32
    %14 = tpu.assume_multiple %13, 8 : i32
    %15 = arith.index_cast %14 : i32 to index
    %c0_11 = arith.constant 0 : index
    %16 = vector.load %arg16[%15, %c0_11] : memref<16x96xf32, #tpu.memory_space<vmem>>, vector<8x32xf32>
    %17 = arith.index_cast %14 : i32 to index
    %c32 = arith.constant 32 : index
    %18 = vector.load %arg16[%17, %c32] : memref<16x96xf32, #tpu.memory_space<vmem>>, vector<8x32xf32>
    %19 = arith.index_cast %14 : i32 to index
    %c64 = arith.constant 64 : index
    %20 = vector.load %arg16[%19, %c64] : memref<16x96xf32, #tpu.memory_space<vmem>>, vector<8x32xf32>
    %21 = vector.extract_strided_slice %16 {offsets = [0, 0], sizes = [8, 8], strides = [1, 1]} : vector<8x32xf32> to vector<8x8xf32>
    %22 = arith.truncf %21 : vector<8x8xf32> to vector<8x8xbf16>
    %23 = vector.extract_strided_slice %18 {offsets = [0, 0], sizes = [8, 8], strides = [1, 1]} : vector<8x32xf32> to vector<8x8xf32>
    %24 = arith.truncf %23 : vector<8x8xf32> to vector<8x8xbf16>
    %25 = vector.extract_strided_slice %20 {offsets = [0, 0], sizes = [8, 8], strides = [1, 1]} : vector<8x32xf32> to vector<8x8xf32>
    %26 = arith.truncf %25 : vector<8x8xf32> to vector<8x8xbf16>
    %cst_12 = arith.constant dense<0.000000e+00> : vector<8x8xf32>
    %27 = tpu.matmul %22, %24, %cst_12 {dimension_numbers = #tpu.dot_dimension_numbers<[1], [1], [0], [0], [0, 0, 1, 0], [], []>} : vector<8x8xbf16>, vector<8x8xbf16>, vector<8x8xf32> -> vector<8x8xf32>
    %cst_13 = arith.constant 0.353553385 : f32
    %28 = vector.broadcast %cst_13 : f32 to vector<8x8xf32>
    %29 = arith.mulf %27, %28 : vector<8x8xf32>
    %cst_14 = arith.constant dense<0xFF800000> : vector<8xf32>
    %30 = vector.multi_reduction <maximumf>, %29, %cst_14 [1] : vector<8x8xf32> to vector<8xf32>
    %31 = vector.shape_cast %30 : vector<8xf32> to vector<8x1xf32>
    %32 = vector.broadcast %31 : vector<8x1xf32> to vector<8x8xf32>
    %33 = arith.subf %29, %32 : vector<8x8xf32>
    %34 = math.exp %33 : vector<8x8xf32>
    %cst_15 = arith.constant dense<0.000000e+00> : vector<8xf32>
    %35 = vector.multi_reduction <add>, %34, %cst_15 [1] : vector<8x8xf32> to vector<8xf32>
    %36 = vector.shape_cast %35 : vector<8xf32> to vector<8x1xf32>
    %37 = tpu.reciprocal %36 {approx = true} : vector<8x1xf32> -> vector<8x1xf32>
    %38 = vector.broadcast %37 : vector<8x1xf32> to vector<8x8xf32>
    %39 = arith.mulf %34, %38 : vector<8x8xf32>
    %40 = arith.truncf %39 : vector<8x8xf32> to vector<8x8xbf16>
    %cst_16 = arith.constant dense<0.000000e+00> : vector<8x8xf32>
    %41 = tpu.matmul %40, %26, %cst_16 {dimension_numbers = #tpu.dot_dimension_numbers<[1], [0], [0], [1], [0, 0, 1, 1], [], []>} : vector<8x8xbf16>, vector<8x8xbf16>, vector<8x8xf32> -> vector<8x8xf32>
    %42 = arith.index_cast %14 : i32 to index
    %c0_17 = arith.constant 0 : index
    %43 = vector.load %arg17[%42, %c0_17] : memref<16x32xf32, #tpu.memory_space<vmem>>, vector<8x8xf32>
    tpu.vector_store %arg17[%42, %c0_17], %41 {strides = array<i32>} : memref<16x32xf32, #tpu.memory_space<vmem>>, vector<8x8xf32>,
    %44 = vector.extract_strided_slice %16 {offsets = [0, 8], sizes = [8, 8], strides = [1, 1]} : vector<8x32xf32> to vector<8x8xf32>
    %45 = arith.truncf %44 : vector<8x8xf32> to vector<8x8xbf16>
    %46 = vector.extract_strided_slice %18 {offsets = [0, 8], sizes = [8, 8], strides = [1, 1]} : vector<8x32xf32> to vector<8x8xf32>
    %47 = arith.truncf %46 : vector<8x8xf32> to vector<8x8xbf16>
    %48 = vector.extract_strided_slice %20 {offsets = [0, 8], sizes = [8, 8], strides = [1, 1]} : vector<8x32xf32> to vector<8x8xf32>
    %49 = arith.truncf %48 : vector<8x8xf32> to vector<8x8xbf16>
    %cst_18 = arith.constant dense<0.000000e+00> : vector<8x8xf32>
    %50 = tpu.matmul %45, %47, %cst_18 {dimension_numbers = #tpu.dot_dimension_numbers<[1], [1], [0], [0], [0, 0, 1, 0], [], []>} : vector<8x8xbf16>, vector<8x8xbf16>, vector<8x8xf32> -> vector<8x8xf32>
    %cst_19 = arith.constant 0.353553385 : f32
    %51 = vector.broadcast %cst_19 : f32 to vector<8x8xf32>
    %52 = arith.mulf %50, %51 : vector<8x8xf32>
    %cst_20 = arith.constant dense<0xFF800000> : vector<8xf32>
    %53 = vector.multi_reduction <maximumf>, %52, %cst_20 [1] : vector<8x8xf32> to vector<8xf32>
    %54 = vector.shape_cast %53 : vector<8xf32> to vector<8x1xf32>
    %55 = vector.broadcast %54 : vector<8x1xf32> to vector<8x8xf32>
    %56 = arith.subf %52, %55 : vector<8x8xf32>
    %57 = math.exp %56 : vector<8x8xf32>
    %cst_21 = arith.constant dense<0.000000e+00> : vector<8xf32>
    %58 = vector.multi_reduction <add>, %57, %cst_21 [1] : vector<8x8xf32> to vector<8xf32>
    %59 = vector.shape_cast %58 : vector<8xf32> to vector<8x1xf32>
    %60 = tpu.reciprocal %59 {approx = true} : vector<8x1xf32> -> vector<8x1xf32>
    %61 = vector.broadcast %60 : vector<8x1xf32> to vector<8x8xf32>
    %62 = arith.mulf %57, %61 : vector<8x8xf32>
    %63 = arith.truncf %62 : vector<8x8xf32> to vector<8x8xbf16>
    %cst_22 = arith.constant dense<0.000000e+00> : vector<8x8xf32>
    %64 = tpu.matmul %63, %49, %cst_22 {dimension_numbers = #tpu.dot_dimension_numbers<[1], [0], [0], [1], [0, 0, 1, 1], [], []>} : vector<8x8xbf16>, vector<8x8xbf16>, vector<8x8xf32> -> vector<8x8xf32>
    %65 = arith.index_cast %14 : i32 to index
    %c8 = arith.constant 8 : index
    %66 = vector.load %arg17[%65, %c8] : memref<16x32xf32, #tpu.memory_space<vmem>>, vector<8x8xf32>
    tpu.vector_store %arg17[%65, %c8], %64 {strides = array<i32>} : memref<16x32xf32, #tpu.memory_space<vmem>>, vector<8x8xf32>,
    %67 = vector.extract_strided_slice %16 {offsets = [0, 16], sizes = [8, 8], strides = [1, 1]} : vector<8x32xf32> to vector<8x8xf32>
    %68 = arith.truncf %67 : vector<8x8xf32> to vector<8x8xbf16>
    %69 = vector.extract_strided_slice %18 {offsets = [0, 16], sizes = [8, 8], strides = [1, 1]} : vector<8x32xf32> to vector<8x8xf32>
    %70 = arith.truncf %69 : vector<8x8xf32> to vector<8x8xbf16>
    %71 = vector.extract_strided_slice %20 {offsets = [0, 16], sizes = [8, 8], strides = [1, 1]} : vector<8x32xf32> to vector<8x8xf32>
    %72 = arith.truncf %71 : vector<8x8xf32> to vector<8x8xbf16>
    %cst_23 = arith.constant dense<0.000000e+00> : vector<8x8xf32>
    %73 = tpu.matmul %68, %70, %cst_23 {dimension_numbers = #tpu.dot_dimension_numbers<[1], [1], [0], [0], [0, 0, 1, 0], [], []>} : vector<8x8xbf16>, vector<8x8xbf16>, vector<8x8xf32> -> vector<8x8xf32>
    %cst_24 = arith.constant 0.353553385 : f32
    %74 = vector.broadcast %cst_24 : f32 to vector<8x8xf32>
    %75 = arith.mulf %73, %74 : vector<8x8xf32>
    %cst_25 = arith.constant dense<0xFF800000> : vector<8xf32>
    %76 = vector.multi_reduction <maximumf>, %75, %cst_25 [1] : vector<8x8xf32> to vector<8xf32>
    %77 = vector.shape_cast %76 : vector<8xf32> to vector<8x1xf32>
    %78 = vector.broadcast %77 : vector<8x1xf32> to vector<8x8xf32>
    %79 = arith.subf %75, %78 : vector<8x8xf32>
    %80 = math.exp %79 : vector<8x8xf32>
    %cst_26 = arith.constant dense<0.000000e+00> : vector<8xf32>
    %81 = vector.multi_reduction <add>, %80, %cst_26 [1] : vector<8x8xf32> to vector<8xf32>
    %82 = vector.shape_cast %81 : vector<8xf32> to vector<8x1xf32>
    %83 = tpu.reciprocal %82 {approx = true} : vector<8x1xf32> -> vector<8x1xf32>
    %84 = vector.broadcast %83 : vector<8x1xf32> to vector<8x8xf32>
    %85 = arith.mulf %80, %84 : vector<8x8xf32>
    %86 = arith.truncf %85 : vector<8x8xf32> to vector<8x8xbf16>
    %cst_27 = arith.constant dense<0.000000e+00> : vector<8x8xf32>
    %87 = tpu.matmul %86, %72, %cst_27 {dimension_numbers = #tpu.dot_dimension_numbers<[1], [0], [0], [1], [0, 0, 1, 1], [], []>} : vector<8x8xbf16>, vector<8x8xbf16>, vector<8x8xf32> -> vector<8x8xf32>
    %88 = arith.index_cast %14 : i32 to index
    %c16 = arith.constant 16 : index
    %89 = vector.load %arg17[%88, %c16] : memref<16x32xf32, #tpu.memory_space<vmem>>, vector<8x8xf32>
    tpu.vector_store %arg17[%88, %c16], %87 {strides = array<i32>} : memref<16x32xf32, #tpu.memory_space<vmem>>, vector<8x8xf32>,
    %90 = vector.extract_strided_slice %16 {offsets = [0, 24], sizes = [8, 8], strides = [1, 1]} : vector<8x32xf32> to vector<8x8xf32>
    %91 = arith.truncf %90 : vector<8x8xf32> to vector<8x8xbf16>
    %92 = vector.extract_strided_slice %18 {offsets = [0, 24], sizes = [8, 8], strides = [1, 1]} : vector<8x32xf32> to vector<8x8xf32>
    %93 = arith.truncf %92 : vector<8x8xf32> to vector<8x8xbf16>
    %94 = vector.extract_strided_slice %20 {offsets = [0, 24], sizes = [8, 8], strides = [1, 1]} : vector<8x32xf32> to vector<8x8xf32>
    %95 = arith.truncf %94 : vector<8x8xf32> to vector<8x8xbf16>
    %cst_28 = arith.constant dense<0.000000e+00> : vector<8x8xf32>
    %96 = tpu.matmul %91, %93, %cst_28 {dimension_numbers = #tpu.dot_dimension_numbers<[1], [1], [0], [0], [0, 0, 1, 0], [], []>} : vector<8x8xbf16>, vector<8x8xbf16>, vector<8x8xf32> -> vector<8x8xf32>
    %cst_29 = arith.constant 0.353553385 : f32
    %97 = vector.broadcast %cst_29 : f32 to vector<8x8xf32>
    %98 = arith.mulf %96, %97 : vector<8x8xf32>
    %cst_30 = arith.constant dense<0xFF800000> : vector<8xf32>
    %99 = vector.multi_reduction <maximumf>, %98, %cst_30 [1] : vector<8x8xf32> to vector<8xf32>
    %100 = vector.shape_cast %99 : vector<8xf32> to vector<8x1xf32>
    %101 = vector.broadcast %100 : vector<8x1xf32> to vector<8x8xf32>
    %102 = arith.subf %98, %101 : vector<8x8xf32>
    %103 = math.exp %102 : vector<8x8xf32>
    %cst_31 = arith.constant dense<0.000000e+00> : vector<8xf32>
    %104 = vector.multi_reduction <add>, %103, %cst_31 [1] : vector<8x8xf32> to vector<8xf32>
    %105 = vector.shape_cast %104 : vector<8xf32> to vector<8x1xf32>
    %106 = tpu.reciprocal %105 {approx = true} : vector<8x1xf32> -> vector<8x1xf32>
    %107 = vector.broadcast %106 : vector<8x1xf32> to vector<8x8xf32>
    %108 = arith.mulf %103, %107 : vector<8x8xf32>
    %109 = arith.truncf %108 : vector<8x8xf32> to vector<8x8xbf16>
    %cst_32 = arith.constant dense<0.000000e+00> : vector<8x8xf32>
    %110 = tpu.matmul %109, %95, %cst_32 {dimension_numbers = #tpu.dot_dimension_numbers<[1], [0], [0], [1], [0, 0, 1, 1], [], []>} : vector<8x8xbf16>, vector<8x8xbf16>, vector<8x8xf32> -> vector<8x8xf32>
    %111 = arith.index_cast %14 : i32 to index
    %c24 = arith.constant 24 : index
    %112 = vector.load %arg17[%111, %c24] : memref<16x32xf32, #tpu.memory_space<vmem>>, vector<8x8xf32>
    tpu.vector_store %arg17[%111, %c24], %110 {strides = array<i32>} : memref<16x32xf32, #tpu.memory_space<vmem>>, vector<8x8xf32>,
    %c1_i32 = arith.constant 1 : i32
    %c8_i32_33 = arith.constant 8 : i32
    %113 = arith.muli %c1_i32, %c8_i32_33 : i32
    %114 = tpu.assume_multiple %113, 8 : i32
    %115 = arith.index_cast %114 : i32 to index
    %c0_34 = arith.constant 0 : index
    %116 = vector.load %arg16[%115, %c0_34] : memref<16x96xf32, #tpu.memory_space<vmem>>, vector<8x32xf32>
    %117 = arith.index_cast %114 : i32 to index
    %c32_35 = arith.constant 32 : index
    %118 = vector.load %arg16[%117, %c32_35] : memref<16x96xf32, #tpu.memory_space<vmem>>, vector<8x32xf32>
    %119 = arith.index_cast %114 : i32 to index
    %c64_36 = arith.constant 64 : index
    %120 = vector.load %arg16[%119, %c64_36] : memref<16x96xf32, #tpu.memory_space<vmem>>, vector<8x32xf32>
    %121 = vector.extract_strided_slice %116 {offsets = [0, 0], sizes = [8, 8], strides = [1, 1]} : vector<8x32xf32> to vector<8x8xf32>
    %122 = arith.truncf %121 : vector<8x8xf32> to vector<8x8xbf16>
    %123 = vector.extract_strided_slice %118 {offsets = [0, 0], sizes = [8, 8], strides = [1, 1]} : vector<8x32xf32> to vector<8x8xf32>
    %124 = arith.truncf %123 : vector<8x8xf32> to vector<8x8xbf16>
    %125 = vector.extract_strided_slice %120 {offsets = [0, 0], sizes = [8, 8], strides = [1, 1]} : vector<8x32xf32> to vector<8x8xf32>
    %126 = arith.truncf %125 : vector<8x8xf32> to vector<8x8xbf16>
    %cst_37 = arith.constant dense<0.000000e+00> : vector<8x8xf32>
    %127 = tpu.matmul %122, %124, %cst_37 {dimension_numbers = #tpu.dot_dimension_numbers<[1], [1], [0], [0], [0, 0, 1, 0], [], []>} : vector<8x8xbf16>, vector<8x8xbf16>, vector<8x8xf32> -> vector<8x8xf32>
    %cst_38 = arith.constant 0.353553385 : f32
    %128 = vector.broadcast %cst_38 : f32 to vector<8x8xf32>
    %129 = arith.mulf %127, %128 : vector<8x8xf32>
    %cst_39 = arith.constant dense<0xFF800000> : vector<8xf32>
    %130 = vector.multi_reduction <maximumf>, %129, %cst_39 [1] : vector<8x8xf32> to vector<8xf32>
    %131 = vector.shape_cast %130 : vector<8xf32> to vector<8x1xf32>
    %132 = vector.broadcast %131 : vector<8x1xf32> to vector<8x8xf32>
    %133 = arith.subf %129, %132 : vector<8x8xf32>
    %134 = math.exp %133 : vector<8x8xf32>
    %cst_40 = arith.constant dense<0.000000e+00> : vector<8xf32>
    %135 = vector.multi_reduction <add>, %134, %cst_40 [1] : vector<8x8xf32> to vector<8xf32>
    %136 = vector.shape_cast %135 : vector<8xf32> to vector<8x1xf32>
    %137 = tpu.reciprocal %136 {approx = true} : vector<8x1xf32> -> vector<8x1xf32>
    %138 = vector.broadcast %137 : vector<8x1xf32> to vector<8x8xf32>
    %139 = arith.mulf %134, %138 : vector<8x8xf32>
    %140 = arith.truncf %139 : vector<8x8xf32> to vector<8x8xbf16>
    %cst_41 = arith.constant dense<0.000000e+00> : vector<8x8xf32>
    %141 = tpu.matmul %140, %126, %cst_41 {dimension_numbers = #tpu.dot_dimension_numbers<[1], [0], [0], [1], [0, 0, 1, 1], [], []>} : vector<8x8xbf16>, vector<8x8xbf16>, vector<8x8xf32> -> vector<8x8xf32>
    %142 = arith.index_cast %114 : i32 to index
    %c0_42 = arith.constant 0 : index
    %143 = vector.load %arg17[%142, %c0_42] : memref<16x32xf32, #tpu.memory_space<vmem>>, vector<8x8xf32>
    tpu.vector_store %arg17[%142, %c0_42], %141 {strides = array<i32>} : memref<16x32xf32, #tpu.memory_space<vmem>>, vector<8x8xf32>,
    %144 = vector.extract_strided_slice %116 {offsets = [0, 8], sizes = [8, 8], strides = [1, 1]} : vector<8x32xf32> to vector<8x8xf32>
    %145 = arith.truncf %144 : vector<8x8xf32> to vector<8x8xbf16>
    %146 = vector.extract_strided_slice %118 {offsets = [0, 8], sizes = [8, 8], strides = [1, 1]} : vector<8x32xf32> to vector<8x8xf32>
    %147 = arith.truncf %146 : vector<8x8xf32> to vector<8x8xbf16>
    %148 = vector.extract_strided_slice %120 {offsets = [0, 8], sizes = [8, 8], strides = [1, 1]} : vector<8x32xf32> to vector<8x8xf32>
    %149 = arith.truncf %148 : vector<8x8xf32> to vector<8x8xbf16>
    %cst_43 = arith.constant dense<0.000000e+00> : vector<8x8xf32>
    %150 = tpu.matmul %145, %147, %cst_43 {dimension_numbers = #tpu.dot_dimension_numbers<[1], [1], [0], [0], [0, 0, 1, 0], [], []>} : vector<8x8xbf16>, vector<8x8xbf16>, vector<8x8xf32> -> vector<8x8xf32>
    %cst_44 = arith.constant 0.353553385 : f32
    %151 = vector.broadcast %cst_44 : f32 to vector<8x8xf32>
    %152 = arith.mulf %150, %151 : vector<8x8xf32>
    %cst_45 = arith.constant dense<0xFF800000> : vector<8xf32>
    %153 = vector.multi_reduction <maximumf>, %152, %cst_45 [1] : vector<8x8xf32> to vector<8xf32>
    %154 = vector.shape_cast %153 : vector<8xf32> to vector<8x1xf32>
    %155 = vector.broadcast %154 : vector<8x1xf32> to vector<8x8xf32>
    %156 = arith.subf %152, %155 : vector<8x8xf32>
    %157 = math.exp %156 : vector<8x8xf32>
    %cst_46 = arith.constant dense<0.000000e+00> : vector<8xf32>
    %158 = vector.multi_reduction <add>, %157, %cst_46 [1] : vector<8x8xf32> to vector<8xf32>
    %159 = vector.shape_cast %158 : vector<8xf32> to vector<8x1xf32>
    %160 = tpu.reciprocal %159 {approx = true} : vector<8x1xf32> -> vector<8x1xf32>
    %161 = vector.broadcast %160 : vector<8x1xf32> to vector<8x8xf32>
    %162 = arith.mulf %157, %161 : vector<8x8xf32>
    %163 = arith.truncf %162 : vector<8x8xf32> to vector<8x8xbf16>
    %cst_47 = arith.constant dense<0.000000e+00> : vector<8x8xf32>
    %164 = tpu.matmul %163, %149, %cst_47 {dimension_numbers = #tpu.dot_dimension_numbers<[1], [0], [0], [1], [0, 0, 1, 1], [], []>} : vector<8x8xbf16>, vector<8x8xbf16>, vector<8x8xf32> -> vector<8x8xf32>
    %165 = arith.index_cast %114 : i32 to index
    %c8_48 = arith.constant 8 : index
    %166 = vector.load %arg17[%165, %c8_48] : memref<16x32xf32, #tpu.memory_space<vmem>>, vector<8x8xf32>
    tpu.vector_store %arg17[%165, %c8_48], %164 {strides = array<i32>} : memref<16x32xf32, #tpu.memory_space<vmem>>, vector<8x8xf32>,
    %167 = vector.extract_strided_slice %116 {offsets = [0, 16], sizes = [8, 8], strides = [1, 1]} : vector<8x32xf32> to vector<8x8xf32>
    %168 = arith.truncf %167 : vector<8x8xf32> to vector<8x8xbf16>
    %169 = vector.extract_strided_slice %118 {offsets = [0, 16], sizes = [8, 8], strides = [1, 1]} : vector<8x32xf32> to vector<8x8xf32>
    %170 = arith.truncf %169 : vector<8x8xf32> to vector<8x8xbf16>
    %171 = vector.extract_strided_slice %120 {offsets = [0, 16], sizes = [8, 8], strides = [1, 1]} : vector<8x32xf32> to vector<8x8xf32>
    %172 = arith.truncf %171 : vector<8x8xf32> to vector<8x8xbf16>
    %cst_49 = arith.constant dense<0.000000e+00> : vector<8x8xf32>
    %173 = tpu.matmul %168, %170, %cst_49 {dimension_numbers = #tpu.dot_dimension_numbers<[1], [1], [0], [0], [0, 0, 1, 0], [], []>} : vector<8x8xbf16>, vector<8x8xbf16>, vector<8x8xf32> -> vector<8x8xf32>
    %cst_50 = arith.constant 0.353553385 : f32
    %174 = vector.broadcast %cst_50 : f32 to vector<8x8xf32>
    %175 = arith.mulf %173, %174 : vector<8x8xf32>
    %cst_51 = arith.constant dense<0xFF800000> : vector<8xf32>
    %176 = vector.multi_reduction <maximumf>, %175, %cst_51 [1] : vector<8x8xf32> to vector<8xf32>
    %177 = vector.shape_cast %176 : vector<8xf32> to vector<8x1xf32>
    %178 = vector.broadcast %177 : vector<8x1xf32> to vector<8x8xf32>
    %179 = arith.subf %175, %178 : vector<8x8xf32>
    %180 = math.exp %179 : vector<8x8xf32>
    %cst_52 = arith.constant dense<0.000000e+00> : vector<8xf32>
    %181 = vector.multi_reduction <add>, %180, %cst_52 [1] : vector<8x8xf32> to vector<8xf32>
    %182 = vector.shape_cast %181 : vector<8xf32> to vector<8x1xf32>
    %183 = tpu.reciprocal %182 {approx = true} : vector<8x1xf32> -> vector<8x1xf32>
    %184 = vector.broadcast %183 : vector<8x1xf32> to vector<8x8xf32>
    %185 = arith.mulf %180, %184 : vector<8x8xf32>
    %186 = arith.truncf %185 : vector<8x8xf32> to vector<8x8xbf16>
    %cst_53 = arith.constant dense<0.000000e+00> : vector<8x8xf32>
    %187 = tpu.matmul %186, %172, %cst_53 {dimension_numbers = #tpu.dot_dimension_numbers<[1], [0], [0], [1], [0, 0, 1, 1], [], []>} : vector<8x8xbf16>, vector<8x8xbf16>, vector<8x8xf32> -> vector<8x8xf32>
    %188 = arith.index_cast %114 : i32 to index
    %c16_54 = arith.constant 16 : index
    %189 = vector.load %arg17[%188, %c16_54] : memref<16x32xf32, #tpu.memory_space<vmem>>, vector<8x8xf32>
    tpu.vector_store %arg17[%188, %c16_54], %187 {strides = array<i32>} : memref<16x32xf32, #tpu.memory_space<vmem>>, vector<8x8xf32>,
    %190 = vector.extract_strided_slice %116 {offsets = [0, 24], sizes = [8, 8], strides = [1, 1]} : vector<8x32xf32> to vector<8x8xf32>
    %191 = arith.truncf %190 : vector<8x8xf32> to vector<8x8xbf16>
    %192 = vector.extract_strided_slice %118 {offsets = [0, 24], sizes = [8, 8], strides = [1, 1]} : vector<8x32xf32> to vector<8x8xf32>
    %193 = arith.truncf %192 : vector<8x8xf32> to vector<8x8xbf16>
    %194 = vector.extract_strided_slice %120 {offsets = [0, 24], sizes = [8, 8], strides = [1, 1]} : vector<8x32xf32> to vector<8x8xf32>
    %195 = arith.truncf %194 : vector<8x8xf32> to vector<8x8xbf16>
    %cst_55 = arith.constant dense<0.000000e+00> : vector<8x8xf32>
    %196 = tpu.matmul %191, %193, %cst_55 {dimension_numbers = #tpu.dot_dimension_numbers<[1], [1], [0], [0], [0, 0, 1, 0], [], []>} : vector<8x8xbf16>, vector<8x8xbf16>, vector<8x8xf32> -> vector<8x8xf32>
    %cst_56 = arith.constant 0.353553385 : f32
    %197 = vector.broadcast %cst_56 : f32 to vector<8x8xf32>
    %198 = arith.mulf %196, %197 : vector<8x8xf32>
    %cst_57 = arith.constant dense<0xFF800000> : vector<8xf32>
    %199 = vector.multi_reduction <maximumf>, %198, %cst_57 [1] : vector<8x8xf32> to vector<8xf32>
    %200 = vector.shape_cast %199 : vector<8xf32> to vector<8x1xf32>
    %201 = vector.broadcast %200 : vector<8x1xf32> to vector<8x8xf32>
    %202 = arith.subf %198, %201 : vector<8x8xf32>
    %203 = math.exp %202 : vector<8x8xf32>
    %cst_58 = arith.constant dense<0.000000e+00> : vector<8xf32>
    %204 = vector.multi_reduction <add>, %203, %cst_58 [1] : vector<8x8xf32> to vector<8xf32>
    %205 = vector.shape_cast %204 : vector<8xf32> to vector<8x1xf32>
    %206 = tpu.reciprocal %205 {approx = true} : vector<8x1xf32> -> vector<8x1xf32>
    %207 = vector.broadcast %206 : vector<8x1xf32> to vector<8x8xf32>
    %208 = arith.mulf %203, %207 : vector<8x8xf32>
    %209 = arith.truncf %208 : vector<8x8xf32> to vector<8x8xbf16>
    %cst_59 = arith.constant dense<0.000000e+00> : vector<8x8xf32>
    %210 = tpu.matmul %209, %195, %cst_59 {dimension_numbers = #tpu.dot_dimension_numbers<[1], [0], [0], [1], [0, 0, 1, 1], [], []>} : vector<8x8xbf16>, vector<8x8xbf16>, vector<8x8xf32> -> vector<8x8xf32>
    %211 = arith.index_cast %114 : i32 to index
    %c24_60 = arith.constant 24 : index
    %212 = vector.load %arg17[%211, %c24_60] : memref<16x32xf32, #tpu.memory_space<vmem>>, vector<8x8xf32>
    tpu.vector_store %arg17[%211, %c24_60], %210 {strides = array<i32>} : memref<16x32xf32, #tpu.memory_space<vmem>>, vector<8x8xf32>,
    %c2_i32 = arith.constant 2 : i32
    %c0_61 = arith.constant 0 : index
    %c0_62 = arith.constant 0 : index
    %213 = vector.load %arg17[%c0_61, %c0_62] : memref<16x32xf32, #tpu.memory_space<vmem>>, vector<16x32xf32>
    %214 = arith.truncf %213 : vector<16x32xf32> to vector<16x32xbf16>
    %c0_63 = arith.constant 0 : index
    %c0_64 = arith.constant 0 : index
    %c0_65 = arith.constant 0 : index
    %215 = vector.load %arg4[%c0_63, %c0_64, %c0_65] : memref<1x32x32xbf16, #tpu.memory_space<vmem>>, vector<1x32x32xbf16>
    %216 = vector.shape_cast %215 : vector<1x32x32xbf16> to vector<32x32xbf16>
    %cst_66 = arith.constant dense<0.000000e+00> : vector<16x32xf32>
    %217 = tpu.matmul %214, %216, %cst_66 {dimension_numbers = #tpu.dot_dimension_numbers<[1], [0], [0], [1], [0, 0, 1, 1], [], []>} : vector<16x32xbf16>, vector<32x32xbf16>, vector<16x32xf32> -> vector<16x32xf32>
    %c0_67 = arith.constant 0 : index
    %c0_68 = arith.constant 0 : index
    %c0_69 = arith.constant 0 : index
    %218 = vector.load %arg5[%c0_67, %c0_68, %c0_69] : memref<1x1x32xf32, #tpu.memory_space<vmem>>, vector<1x1x32xf32>
    %219 = vector.shape_cast %218 : vector<1x1x32xf32> to vector<1x32xf32>
    %220 = vector.broadcast %219 : vector<1x32xf32> to vector<16x32xf32>
    %221 = arith.addf %217, %220 : vector<16x32xf32>
    %222 = arith.addf %3, %221 : vector<16x32xf32>
    %c0_70 = arith.constant 0 : index
    %c0_71 = arith.constant 0 : index
    %c0_72 = arith.constant 0 : index
    %223 = vector.load %arg6[%c0_70, %c0_71, %c0_72] : memref<1x1x32xf32, #tpu.memory_space<vmem>>, vector<1x1x32xf32>
    %224 = vector.shape_cast %223 : vector<1x1x32xf32> to vector<1x32xf32>
    %c0_73 = arith.constant 0 : index
    %c0_74 = arith.constant 0 : index
    %c0_75 = arith.constant 0 : index
    %225 = vector.load %arg7[%c0_73, %c0_74, %c0_75] : memref<1x1x32xf32, #tpu.memory_space<vmem>>, vector<1x1x32xf32>
    %226 = vector.shape_cast %225 : vector<1x1x32xf32> to vector<1x32xf32>
    %cst_76 = arith.constant dense<0.000000e+00> : vector<16xf32>
    %227 = vector.multi_reduction <add>, %222, %cst_76 [1] : vector<16x32xf32> to vector<16xf32>
    %228 = vector.shape_cast %227 : vector<16xf32> to vector<16x1xf32>
    %cst_77 = arith.constant 3.200000e+01 : f32
    %229 = vector.broadcast %cst_77 : f32 to vector<16x1xf32>
    %230 = arith.divf %228, %229 : vector<16x1xf32>
    %231 = vector.broadcast %230 : vector<16x1xf32> to vector<16x32xf32>
    %232 = arith.subf %222, %231 : vector<16x32xf32>
    %233 = vector.broadcast %230 : vector<16x1xf32> to vector<16x32xf32>
    %234 = arith.subf %222, %233 : vector<16x32xf32>
    %235 = arith.mulf %232, %234 : vector<16x32xf32>
    %cst_78 = arith.constant dense<0.000000e+00> : vector<16xf32>
    %236 = vector.multi_reduction <add>, %235, %cst_78 [1] : vector<16x32xf32> to vector<16xf32>
    %237 = vector.shape_cast %236 : vector<16xf32> to vector<16x1xf32>
    %cst_79 = arith.constant 3.200000e+01 : f32
    %238 = vector.broadcast %cst_79 : f32 to vector<16x1xf32>
    %239 = arith.divf %237, %238 : vector<16x1xf32>
    %240 = vector.broadcast %230 : vector<16x1xf32> to vector<16x32xf32>
    %241 = arith.subf %222, %240 : vector<16x32xf32>
    %cst_80 = arith.constant 9.99999974E-6 : f32
    %242 = vector.broadcast %cst_80 : f32 to vector<16x1xf32>
    %243 = arith.addf %239, %242 : vector<16x1xf32>
    %244 = math.rsqrt %243 : vector<16x1xf32>
    %245 = vector.broadcast %244 : vector<16x1xf32> to vector<16x32xf32>
    %246 = arith.mulf %241, %245 : vector<16x32xf32>
    %247 = vector.broadcast %224 : vector<1x32xf32> to vector<16x32xf32>
    %248 = arith.mulf %246, %247 : vector<16x32xf32>
    %249 = vector.broadcast %226 : vector<1x32xf32> to vector<16x32xf32>
    %250 = arith.addf %248, %249 : vector<16x32xf32>
    %251 = arith.truncf %250 : vector<16x32xf32> to vector<16x32xbf16>
    %c0_81 = arith.constant 0 : index
    %c0_82 = arith.constant 0 : index
    %c0_83 = arith.constant 0 : index
    %252 = vector.load %arg8[%c0_81, %c0_82, %c0_83] : memref<1x32x64xbf16, #tpu.memory_space<vmem>>, vector<1x32x64xbf16>
    %253 = vector.shape_cast %252 : vector<1x32x64xbf16> to vector<32x64xbf16>
    %cst_84 = arith.constant dense<0.000000e+00> : vector<16x64xf32>
    %254 = tpu.matmul %251, %253, %cst_84 {dimension_numbers = #tpu.dot_dimension_numbers<[1], [0], [0], [1], [0, 0, 1, 1], [], []>} : vector<16x32xbf16>, vector<32x64xbf16>, vector<16x64xf32> -> vector<16x64xf32>
    %c0_85 = arith.constant 0 : index
    %c0_86 = arith.constant 0 : index
    %c0_87 = arith.constant 0 : index
    %255 = vector.load %arg9[%c0_85, %c0_86, %c0_87] : memref<1x1x64xf32, #tpu.memory_space<vmem>>, vector<1x1x64xf32>
    %256 = vector.shape_cast %255 : vector<1x1x64xf32> to vector<1x64xf32>
    %257 = vector.broadcast %256 : vector<1x64xf32> to vector<16x64xf32>
    %258 = arith.addf %254, %257 : vector<16x64xf32>
    %cst_88 = arith.constant 0.000000e+00 : f32
    %259 = vector.broadcast %cst_88 : f32 to vector<16x64xf32>
    %260 = arith.maximumf %258, %259 : vector<16x64xf32>
    %261 = arith.truncf %260 : vector<16x64xf32> to vector<16x64xbf16>
    %c0_89 = arith.constant 0 : index
    %c0_90 = arith.constant 0 : index
    %c0_91 = arith.constant 0 : index
    %262 = vector.load %arg10[%c0_89, %c0_90, %c0_91] : memref<1x64x32xbf16, #tpu.memory_space<vmem>>, vector<1x64x32xbf16>
    %263 = vector.shape_cast %262 : vector<1x64x32xbf16> to vector<64x32xbf16>
    %cst_92 = arith.constant dense<0.000000e+00> : vector<16x32xf32>
    %264 = tpu.matmul %261, %263, %cst_92 {dimension_numbers = #tpu.dot_dimension_numbers<[1], [0], [0], [1], [0, 0, 1, 1], [], []>} : vector<16x64xbf16>, vector<64x32xbf16>, vector<16x32xf32> -> vector<16x32xf32>
    %c0_93 = arith.constant 0 : index
    %c0_94 = arith.constant 0 : index
    %c0_95 = arith.constant 0 : index
    %265 = vector.load %arg11[%c0_93, %c0_94, %c0_95] : memref<1x1x32xf32, #tpu.memory_space<vmem>>, vector<1x1x32xf32>
    %266 = vector.shape_cast %265 : vector<1x1x32xf32> to vector<1x32xf32>
    %267 = vector.broadcast %266 : vector<1x32xf32> to vector<16x32xf32>
    %268 = arith.addf %264, %267 : vector<16x32xf32>
    %269 = arith.addf %250, %268 : vector<16x32xf32>
    %c0_96 = arith.constant 0 : index
    %c0_97 = arith.constant 0 : index
    %c0_98 = arith.constant 0 : index
    %270 = vector.load %arg12[%c0_96, %c0_97, %c0_98] : memref<1x1x32xf32, #tpu.memory_space<vmem>>, vector<1x1x32xf32>
    %271 = vector.shape_cast %270 : vector<1x1x32xf32> to vector<1x32xf32>
    %c0_99 = arith.constant 0 : index
    %c0_100 = arith.constant 0 : index
    %c0_101 = arith.constant 0 : index
    %272 = vector.load %arg13[%c0_99, %c0_100, %c0_101] : memref<1x1x32xf32, #tpu.memory_space<vmem>>, vector<1x1x32xf32>
    %273 = vector.shape_cast %272 : vector<1x1x32xf32> to vector<1x32xf32>
    %cst_102 = arith.constant dense<0.000000e+00> : vector<16xf32>
    %274 = vector.multi_reduction <add>, %269, %cst_102 [1] : vector<16x32xf32> to vector<16xf32>
    %275 = vector.shape_cast %274 : vector<16xf32> to vector<16x1xf32>
    %cst_103 = arith.constant 3.200000e+01 : f32
    %276 = vector.broadcast %cst_103 : f32 to vector<16x1xf32>
    %277 = arith.divf %275, %276 : vector<16x1xf32>
    %278 = vector.broadcast %277 : vector<16x1xf32> to vector<16x32xf32>
    %279 = arith.subf %269, %278 : vector<16x32xf32>
    %280 = vector.broadcast %277 : vector<16x1xf32> to vector<16x32xf32>
    %281 = arith.subf %269, %280 : vector<16x32xf32>
    %282 = arith.mulf %279, %281 : vector<16x32xf32>
    %cst_104 = arith.constant dense<0.000000e+00> : vector<16xf32>
    %283 = vector.multi_reduction <add>, %282, %cst_104 [1] : vector<16x32xf32> to vector<16xf32>
    %284 = vector.shape_cast %283 : vector<16xf32> to vector<16x1xf32>
    %cst_105 = arith.constant 3.200000e+01 : f32
    %285 = vector.broadcast %cst_105 : f32 to vector<16x1xf32>
    %286 = arith.divf %284, %285 : vector<16x1xf32>
    %287 = vector.broadcast %277 : vector<16x1xf32> to vector<16x32xf32>
    %288 = arith.subf %269, %287 : vector<16x32xf32>
    %cst_106 = arith.constant 9.99999974E-6 : f32
    %289 = vector.broadcast %cst_106 : f32 to vector<16x1xf32>
    %290 = arith.addf %286, %289 : vector<16x1xf32>
    %291 = math.rsqrt %290 : vector<16x1xf32>
    %292 = vector.broadcast %291 : vector<16x1xf32> to vector<16x32xf32>
    %293 = arith.mulf %288, %292 : vector<16x32xf32>
    %294 = vector.broadcast %271 : vector<1x32xf32> to vector<16x32xf32>
    %295 = arith.mulf %293, %294 : vector<16x32xf32>
    %296 = vector.broadcast %273 : vector<1x32xf32> to vector<16x32xf32>
    %297 = arith.addf %295, %296 : vector<16x32xf32>
    %c0_107 = arith.constant 0 : index
    %c0_108 = arith.constant 0 : index
    %298 = vector.load %arg15[%c0_107, %c0_108] : memref<16x32xf32, #tpu.memory_space<vmem>>, vector<16x32xf32>
    tpu.vector_store %arg15[%c0_107, %c0_108], %297 {strides = array<i32>} : memref<16x32xf32, #tpu.memory_space<vmem>>, vector<16x32xf32>,
    %c0_109 = arith.constant 0 : index
    %c0_110 = arith.constant 0 : index
    %299 = vector.load %arg14[%c0_109, %c0_110] : memref<16x32xf32, #tpu.memory_space<vmem>>, vector<16x32xf32>
    tpu.vector_store %arg14[%c0_109, %c0_110], %297 {strides = array<i32>} : memref<16x32xf32, #tpu.memory_space<vmem>>, vector<16x32xf32>,
    return
  }
  func.func @transform_0(%arg0: i32) -> (i32, i32) {
    %c0_i32 = arith.constant 0 : i32
    %c0_i32_0 = arith.constant 0 : i32
    %c0_i32_1 = arith.constant 0 : i32
    return %c0_i32, %c0_i32_0 : i32, i32
  }
  func.func @transform_1(%arg0: i32) -> (i32, i32, i32) {
    %c0_i32 = arith.constant 0 : i32
    %c0_i32_0 = arith.constant 0 : i32
    %c0_i32_1 = arith.constant 0 : i32
    return %arg0, %c0_i32, %c0_i32_0 : i32, i32, i32
  }
  func.func @transform_2(%arg0: i32) -> (i32, i32, i32) {
    %c0_i32 = arith.constant 0 : i32
    %c0_i32_0 = arith.constant 0 : i32
    %c0_i32_1 = arith.constant 0 : i32
    return %arg0, %c0_i32, %c0_i32_0 : i32, i32, i32
  }
  func.func @transform_3(%arg0: i32) -> (i32, i32, i32) {
    %c0_i32 = arith.constant 0 : i32
    %c0_i32_0 = arith.constant 0 : i32
    %c0_i32_1 = arith.constant 0 : i32
    return %arg0, %c0_i32, %c0_i32_0 : i32, i32, i32
  }
  func.func @transform_4(%arg0: i32) -> (i32, i32, i32) {
    %c0_i32 = arith.constant 0 : i32
    %c0_i32_0 = arith.constant 0 : i32
    %c0_i32_1 = arith.constant 0 : i32
    return %arg0, %c0_i32, %c0_i32_0 : i32, i32, i32
  }
  func.func @transform_5(%arg0: i32) -> (i32, i32, i32) {
    %c0_i32 = arith.constant 0 : i32
    %c0_i32_0 = arith.constant 0 : i32
    %c0_i32_1 = arith.constant 0 : i32
    return %arg0, %c0_i32, %c0_i32_0 : i32, i32, i32
  }
  func.func @transform_6(%arg0: i32) -> (i32, i32, i32) {
    %c0_i32 = arith.constant 0 : i32
    %c0_i32_0 = arith.constant 0 : i32
    %c0_i32_1 = arith.constant 0 : i32
    return %arg0, %c0_i32, %c0_i32_0 : i32, i32, i32
  }
  func.func @transform_7(%arg0: i32) -> (i32, i32, i32) {
    %c0_i32 = arith.constant 0 : i32
    %c0_i32_0 = arith.constant 0 : i32
    %c0_i32_1 = arith.constant 0 : i32
    return %arg0, %c0_i32, %c0_i32_0 : i32, i32, i32
  }
  func.func @transform_8(%arg0: i32) -> (i32, i32, i32) {
    %c0_i32 = arith.constant 0 : i32
    %c0_i32_0 = arith.constant 0 : i32
    %c0_i32_1 = arith.constant 0 : i32
    return %arg0, %c0_i32, %c0_i32_0 : i32, i32, i32
  }
  func.func @transform_9(%arg0: i32) -> (i32, i32, i32) {
    %c0_i32 = arith.constant 0 : i32
    %c0_i32_0 = arith.constant 0 : i32
    %c0_i32_1 = arith.constant 0 : i32
    return %arg0, %c0_i32, %c0_i32_0 : i32, i32, i32
  }
  func.func @transform_10(%arg0: i32) -> (i32, i32, i32) {
    %c0_i32 = arith.constant 0 : i32
    %c0_i32_0 = arith.constant 0 : i32
    %c0_i32_1 = arith.constant 0 : i32
    return %arg0, %c0_i32, %c0_i32_0 : i32, i32, i32
  }
  func.func @transform_11(%arg0: i32) -> (i32, i32, i32) {
    %c0_i32 = arith.constant 0 : i32
    %c0_i32_0 = arith.constant 0 : i32
    %c0_i32_1 = arith.constant 0 : i32
    return %arg0, %c0_i32, %c0_i32_0 : i32, i32, i32
  }
  func.func @transform_12(%arg0: i32) -> (i32, i32, i32) {
    %c0_i32 = arith.constant 0 : i32
    %c0_i32_0 = arith.constant 0 : i32
    %c0_i32_1 = arith.constant 0 : i32
    return %arg0, %c0_i32, %c0_i32_0 : i32, i32, i32
  }
  func.func @transform_13(%arg0: i32) -> (i32, i32) {
    %c0_i32 = arith.constant 0 : i32
    %c0_i32_0 = arith.constant 0 : i32
    %c0_i32_1 = arith.constant 0 : i32
    return %c0_i32, %c0_i32_0 : i32, i32
  }
}

</mosaic_0001>

<llo_original>
// kernel: transformer_encoder.1
$region0: #{transformer_encoder.1}
  #allocation0 [shape = 'u32[]', space=smem, size = 0x4, offset = 0x4, fixed_abs, tag = 'smem constant byte address 0x4 - core index']
  #allocation1 [shape = 'u32[144,128]{1,0:T(1,128)}', space=vmem, size = 0x12000, scoped, tag = 'internal scratch']
  #allocation2 [shape = 'f32[16,32]{1,0:T(8,128)}', space=vmem, size = 0x2000, scoped, tag = 'scratch operand']
  #allocation3 [shape = 'f32[16,96]{1,0:T(8,128)}', space=vmem, size = 0x2000, scoped, tag = 'scratch operand']
  #allocation4 [shape = 'f32[16,32]{1,0:T(8,128)}', space=vmem, size = 0x2000, scoped, tag = 'scratch operand']
  %s0 = inlined_call_operand.vmem [shape: f32[16,32], index: 0, kind: input, shape index: {}]
  %s1 = inlined_call_operand.vmem [shape: bf16[2,32,96], index: 1, kind: input, shape index: {}]
  %s2 = inlined_call_operand.vmem [shape: f32[2,1,96], index: 2, kind: input, shape index: {}]
  %s3 = inlined_call_operand.vmem [shape: bf16[2,32,32], index: 3, kind: input, shape index: {}]
  %s4 = inlined_call_operand.vmem [shape: f32[2,1,32], index: 4, kind: input, shape index: {}]
  %s5 = inlined_call_operand.vmem [shape: f32[2,1,32], index: 5, kind: input, shape index: {}]
  %s6 = inlined_call_operand.vmem [shape: f32[2,1,32], index: 6, kind: input, shape index: {}]
  %s7 = inlined_call_operand.vmem [shape: bf16[2,32,64], index: 7, kind: input, shape index: {}]
  %s8 = inlined_call_operand.vmem [shape: f32[2,1,64], index: 8, kind: input, shape index: {}]
  %s9 = inlined_call_operand.vmem [shape: bf16[2,64,32], index: 9, kind: input, shape index: {}]
  %s10 = inlined_call_operand.vmem [shape: f32[2,1,32], index: 10, kind: input, shape index: {}]
  %s11 = inlined_call_operand.vmem [shape: f32[2,1,32], index: 11, kind: input, shape index: {}]
  %s12 = inlined_call_operand.vmem [shape: f32[2,1,32], index: 12, kind: input, shape index: {}]
  %s13 = inlined_call_operand.vmem [shape: f32[16,32], index: 13, kind: output, shape index: {}]
  %s14 = sld [smem:[#allocation0]]
  $region89: #{transformer_encoder.1} parent=0
    _
  %s16 = ssub.s32 1, %s14
  %s17 = scalar_select 0, %s16, %s14
  loop: start=0, step=1, limit=4
  $region2: #{transformer_encoder.1} parent=0 // loop_pre_header
    _
  $region3: #{transformer_encoder.1} parent=0 // loop_header
    %s19 = sphi 0, %s23
    %p20 = scmp.ge.s32.totalorder %s19, 4
    %s27 = sphi 0, %s27
    %s29 = sphi 0, %s27
    %s30 = sphi 0, %s29
    %s44 = sphi 0, %s30
    %s50 = sphi 0, %s52
    %s53 = sphi 0, %s50
    %s54 = sphi 0, %s53
    %s70 = sphi 0, %s54
    %s76 = sphi 0, %s78
    %s79 = sphi 0, %s76
    %s80 = sphi 0, %s79
    %s96 = sphi 0, %s80
    %s102 = sphi 0, %s104
    %s105 = sphi 0, %s102
    %s106 = sphi 0, %s105
    %s122 = sphi 0, %s106
    %s128 = sphi 0, %s130
    %s131 = sphi 0, %s128
    %s132 = sphi 0, %s131
    %s148 = sphi 0, %s132
    %s154 = sphi 0, %s156
    %s157 = sphi 0, %s154
    %s158 = sphi 0, %s157
    %s174 = sphi 0, %s158
    %s180 = sphi 0, %s182
    %s183 = sphi 0, %s180
    %s184 = sphi 0, %s183
    %s200 = sphi 0, %s184
    %s206 = sphi 0, %s208
    %s209 = sphi 0, %s206
    %s210 = sphi 0, %s209
    %s226 = sphi 0, %s210
    %s232 = sphi 0, %s234
    %s235 = sphi 0, %s232
    %s236 = sphi 0, %s235
    %s252 = sphi 0, %s236
    %s258 = sphi 0, %s260
    %s261 = sphi 0, %s258
    %s262 = sphi 0, %s261
    %s278 = sphi 0, %s262
    %s284 = sphi 0, %s286
    %s287 = sphi 0, %s284
    %s288 = sphi 0, %s287
    %s304 = sphi 0, %s288
    %s310 = sphi 0, %s312
    %s313 = sphi 0, %s310
    %s314 = sphi 0, %s313
    %s330 = sphi 0, %s314
    %s336 = sphi 0, %s338
    %s339 = sphi 0, %s336
    %s340 = sphi 0, %s339
    %s356 = sphi 0, %s340
    %s360 = sphi 0, %s360
    %s362 = sphi 0, %s360
    %s363 = sphi 0, %s362
    %s377 = sphi 0, %s363
  $region4: #{transformer_encoder.1} parent=0 // loop_header_branch
    %22 = sbr.rel (%p20) target = $region8
  $region5: #{transformer_encoder.1} parent=0 // loop_body
    %s24 = ssub.s32 %s19, 1
    %s25 = ssub.s32 %s19, 2
    %s26 = sadd.s32 %s19, 1
    %s28 = sadd.s32 %s27, 1
    %p31 = scmp.eq.s32.totalorder %s19, 1
    %p32 = scmp.ne.s32.totalorder %s27, %s29
    %p33 = scmp.eq.s32.totalorder %s19, 0
    %p34 = por %p32, %p33
    %p35 = scmp.ne.s32.totalorder %s27, %s29
    %p36 = scmp.eq.s32.totalorder %s24, 1
    %p37 = por %p35, %p36
    %p38 = scmp.ne.s32.totalorder %s29, %s30
    %p39 = scmp.eq.s32.totalorder %s24, 0
    %p40 = por %p38, %p39
    %p41 = scmp.ne.s32.totalorder %s29, %s30
    %p42 = scmp.eq.s32.totalorder %s25, 1
    %p43 = por %p41, %p42
    %p45 = scmp.ne.s32.totalorder %s30, %s44
    %p46 = scmp.eq.s32.totalorder %s25, 0
    %p47 = por %p45, %p46
    %s48 = ssub.s32 %s19, %s26
    %p49 = scmp.eq.s32.totalorder %s48, 0
    %s51 = sadd.s32 %s50, 1
    %s52 = scalar_select %p49, %s50, %s51
    %p55 = pneg %p49
    %p56 = scmp.eq.s32.totalorder %s19, 1
    %p57 = por %p55, %p56
    %p58 = scmp.ne.s32.totalorder %s50, %s53
    %p59 = scmp.eq.s32.totalorder %s19, 0
    %p60 = por %p58, %p59
    %p61 = scmp.ne.s32.totalorder %s50, %s53
    %p62 = scmp.eq.s32.totalorder %s24, 1
    %p63 = por %p61, %p62
    %p64 = scmp.ne.s32.totalorder %s53, %s54
    %p65 = scmp.eq.s32.totalorder %s24, 0
    %p66 = por %p64, %p65
    %p67 = scmp.ne.s32.totalorder %s53, %s54
    %p68 = scmp.eq.s32.totalorder %s25, 1
    %p69 = por %p67, %p68
    %p71 = scmp.ne.s32.totalorder %s54, %s70
    %p72 = scmp.eq.s32.totalorder %s25, 0
    %p73 = por %p71, %p72
    %s74 = ssub.s32 %s19, %s26
    %p75 = scmp.eq.s32.totalorder %s74, 0
    %s77 = sadd.s32 %s76, 1
    %s78 = scalar_select %p75, %s76, %s77
    %p81 = pneg %p75
    %p82 = scmp.eq.s32.totalorder %s19, 1
    %p83 = por %p81, %p82
    %p84 = scmp.ne.s32.totalorder %s76, %s79
    %p85 = scmp.eq.s32.totalorder %s19, 0
    %p86 = por %p84, %p85
    %p87 = scmp.ne.s32.totalorder %s76, %s79
    %p88 = scmp.eq.s32.totalorder %s24, 1
    %p89 = por %p87, %p88
    %p90 = scmp.ne.s32.totalorder %s79, %s80
    %p91 = scmp.eq.s32.totalorder %s24, 0
    %p92 = por %p90, %p91
    %p93 = scmp.ne.s32.totalorder %s79, %s80
    %p94 = scmp.eq.s32.totalorder %s25, 1
    %p95 = por %p93, %p94
    %p97 = scmp.ne.s32.totalorder %s80, %s96
    %p98 = scmp.eq.s32.totalorder %s25, 0
    %p99 = por %p97, %p98
    %s100 = ssub.s32 %s19, %s26
    %p101 = scmp.eq.s32.totalorder %s100, 0
    %s103 = sadd.s32 %s102, 1
    %s104 = scalar_select %p101, %s102, %s103
    %p107 = pneg %p101
    %p108 = scmp.eq.s32.totalorder %s19, 1
    %p109 = por %p107, %p108
    %p110 = scmp.ne.s32.totalorder %s102, %s105
    %p111 = scmp.eq.s32.totalorder %s19, 0
    %p112 = por %p110, %p111
    %p113 = scmp.ne.s32.totalorder %s102, %s105
    %p114 = scmp.eq.s32.totalorder %s24, 1
    %p115 = por %p113, %p114
    %p116 = scmp.ne.s32.totalorder %s105, %s106
    %p117 = scmp.eq.s32.totalorder %s24, 0
    %p118 = por %p116, %p117
    %p119 = scmp.ne.s32.totalorder %s105, %s106
    %p120 = scmp.eq.s32.totalorder %s25, 1
    %p121 = por %p119, %p120
    %p123 = scmp.ne.s32.totalorder %s106, %s122
    %p124 = scmp.eq.s32.totalorder %s25, 0
    %p125 = por %p123, %p124
    %s126 = ssub.s32 %s19, %s26
    %p127 = scmp.eq.s32.totalorder %s126, 0
    %s129 = sadd.s32 %s128, 1
    %s130 = scalar_select %p127, %s128, %s129
    %p133 = pneg %p127
    %p134 = scmp.eq.s32.totalorder %s19, 1
    %p135 = por %p133, %p134
    %p136 = scmp.ne.s32.totalorder %s128, %s131
    %p137 = scmp.eq.s32.totalorder %s19, 0
    %p138 = por %p136, %p137
    %p139 = scmp.ne.s32.totalorder %s128, %s131
    %p140 = scmp.eq.s32.totalorder %s24, 1
    %p141 = por %p139, %p140
    %p142 = scmp.ne.s32.totalorder %s131, %s132
    %p143 = scmp.eq.s32.totalorder %s24, 0
    %p144 = por %p142, %p143
    %p145 = scmp.ne.s32.totalorder %s131, %s132
    %p146 = scmp.eq.s32.totalorder %s25, 1
    %p147 = por %p145, %p146
    %p149 = scmp.ne.s32.totalorder %s132, %s148
    %p150 = scmp.eq.s32.totalorder %s25, 0
    %p151 = por %p149, %p150
    %s152 = ssub.s32 %s19, %s26
    %p153 = scmp.eq.s32.totalorder %s152, 0
    %s155 = sadd.s32 %s154, 1
    %s156 = scalar_select %p153, %s154, %s155
    %p159 = pneg %p153
    %p160 = scmp.eq.s32.totalorder %s19, 1
    %p161 = por %p159, %p160
    %p162 = scmp.ne.s32.totalorder %s154, %s157
    %p163 = scmp.eq.s32.totalorder %s19, 0
    %p164 = por %p162, %p163
    %p165 = scmp.ne.s32.totalorder %s154, %s157
    %p166 = scmp.eq.s32.totalorder %s24, 1
    %p167 = por %p165, %p166
    %p168 = scmp.ne.s32.totalorder %s157, %s158
    %p169 = scmp.eq.s32.totalorder %s24, 0
    %p170 = por %p168, %p169
    %p171 = scmp.ne.s32.totalorder %s157, %s158
    %p172 = scmp.eq.s32.totalorder %s25, 1
    %p173 = por %p171, %p172
    %p175 = scmp.ne.s32.totalorder %s158, %s174
    %p176 = scmp.eq.s32.totalorder %s25, 0
    %p177 = por %p175, %p176
    %s178 = ssub.s32 %s19, %s26
    %p179 = scmp.eq.s32.totalorder %s178, 0
    %s181 = sadd.s32 %s180, 1
    %s182 = scalar_select %p179, %s180, %s181
    %p185 = pneg %p179
    %p186 = scmp.eq.s32.totalorder %s19, 1
    %p187 = por %p185, %p186
    %p188 = scmp.ne.s32.totalorder %s180, %s183
    %p189 = scmp.eq.s32.totalorder %s19, 0
    %p190 = por %p188, %p189
    %p191 = scmp.ne.s32.totalorder %s180, %s183
    %p192 = scmp.eq.s32.totalorder %s24, 1
    %p193 = por %p191, %p192
    %p194 = scmp.ne.s32.totalorder %s183, %s184
    %p195 = scmp.eq.s32.totalorder %s24, 0
    %p196 = por %p194, %p195
    %p197 = scmp.ne.s32.totalorder %s183, %s184
    %p198 = scmp.eq.s32.totalorder %s25, 1
    %p199 = por %p197, %p198
    %p201 = scmp.ne.s32.totalorder %s184, %s200
    %p202 = scmp.eq.s32.totalorder %s25, 0
    %p203 = por %p201, %p202
    %s204 = ssub.s32 %s19, %s26
    %p205 = scmp.eq.s32.totalorder %s204, 0
    %s207 = sadd.s32 %s206, 1
    %s208 = scalar_select %p205, %s206, %s207
    %p211 = pneg %p205
    %p212 = scmp.eq.s32.totalorder %s19, 1
    %p213 = por %p211, %p212
    %p214 = scmp.ne.s32.totalorder %s206, %s209
    %p215 = scmp.eq.s32.totalorder %s19, 0
    %p216 = por %p214, %p215
    %p217 = scmp.ne.s32.totalorder %s206, %s209
    %p218 = scmp.eq.s32.totalorder %s24, 1
    %p219 = por %p217, %p218
    %p220 = scmp.ne.s32.totalorder %s209, %s210
    %p221 = scmp.eq.s32.totalorder %s24, 0
    %p222 = por %p220, %p221
    %p223 = scmp.ne.s32.totalorder %s209, %s210
    %p224 = scmp.eq.s32.totalorder %s25, 1
    %p225 = por %p223, %p224
    %p227 = scmp.ne.s32.totalorder %s210, %s226
    %p228 = scmp.eq.s32.totalorder %s25, 0
    %p229 = por %p227, %p228
    %s230 = ssub.s32 %s19, %s26
    %p231 = scmp.eq.s32.totalorder %s230, 0
    %s233 = sadd.s32 %s232, 1
    %s234 = scalar_select %p231, %s232, %s233
    %p237 = pneg %p231
    %p238 = scmp.eq.s32.totalorder %s19, 1
    %p239 = por %p237, %p238
    %p240 = scmp.ne.s32.totalorder %s232, %s235
    %p241 = scmp.eq.s32.totalorder %s19, 0
    %p242 = por %p240, %p241
    %p243 = scmp.ne.s32.totalorder %s232, %s235
    %p244 = scmp.eq.s32.totalorder %s24, 1
    %p245 = por %p243, %p244
    %p246 = scmp.ne.s32.totalorder %s235, %s236
    %p247 = scmp.eq.s32.totalorder %s24, 0
    %p248 = por %p246, %p247
    %p249 = scmp.ne.s32.totalorder %s235, %s236
    %p250 = scmp.eq.s32.totalorder %s25, 1
    %p251 = por %p249, %p250
    %p253 = scmp.ne.s32.totalorder %s236, %s252
    %p254 = scmp.eq.s32.totalorder %s25, 0
    %p255 = por %p253, %p254
    %s256 = ssub.s32 %s19, %s26
    %p257 = scmp.eq.s32.totalorder %s256, 0
    %s259 = sadd.s32 %s258, 1
    %s260 = scalar_select %p257, %s258, %s259
    %p263 = pneg %p257
    %p264 = scmp.eq.s32.totalorder %s19, 1
    %p265 = por %p263, %p264
    %p266 = scmp.ne.s32.totalorder %s258, %s261
    %p267 = scmp.eq.s32.totalorder %s19, 0
    %p268 = por %p266, %p267
    %p269 = scmp.ne.s32.totalorder %s258, %s261
    %p270 = scmp.eq.s32.totalorder %s24, 1
    %p271 = por %p269, %p270
    %p272 = scmp.ne.s32.totalorder %s261, %s262
    %p273 = scmp.eq.s32.totalorder %s24, 0
    %p274 = por %p272, %p273
    %p275 = scmp.ne.s32.totalorder %s261, %s262
    %p276 = scmp.eq.s32.totalorder %s25, 1
    %p277 = por %p275, %p276
    %p279 = scmp.ne.s32.totalorder %s262, %s278
    %p280 = scmp.eq.s32.totalorder %s25, 0
    %p281 = por %p279, %p280
    %s282 = ssub.s32 %s19, %s26
    %p283 = scmp.eq.s32.totalorder %s282, 0
    %s285 = sadd.s32 %s284, 1
    %s286 = scalar_select %p283, %s284, %s285
    %p289 = pneg %p283
    %p290 = scmp.eq.s32.totalorder %s19, 1
    %p291 = por %p289, %p290
    %p292 = scmp.ne.s32.totalorder %s284, %s287
    %p293 = scmp.eq.s32.totalorder %s19, 0
    %p294 = por %p292, %p293
    %p295 = scmp.ne.s32.totalorder %s284, %s287
    %p296 = scmp.eq.s32.totalorder %s24, 1
    %p297 = por %p295, %p296
    %p298 = scmp.ne.s32.totalorder %s287, %s288
    %p299 = scmp.eq.s32.totalorder %s24, 0
    %p300 = por %p298, %p299
    %p301 = scmp.ne.s32.totalorder %s287, %s288
    %p302 = scmp.eq.s32.totalorder %s25, 1
    %p303 = por %p301, %p302
    %p305 = scmp.ne.s32.totalorder %s288, %s304
    %p306 = scmp.eq.s32.totalorder %s25, 0
    %p307 = por %p305, %p306
    %s308 = ssub.s32 %s19, %s26
    %p309 = scmp.eq.s32.totalorder %s308, 0
    %s311 = sadd.s32 %s310, 1
    %s312 = scalar_select %p309, %s310, %s311
    %p315 = pneg %p309
    %p316 = scmp.eq.s32.totalorder %s19, 1
    %p317 = por %p315, %p316
    %p318 = scmp.ne.s32.totalorder %s310, %s313
    %p319 = scmp.eq.s32.totalorder %s19, 0
    %p320 = por %p318, %p319
    %p321 = scmp.ne.s32.totalorder %s310, %s313
    %p322 = scmp.eq.s32.totalorder %s24, 1
    %p323 = por %p321, %p322
    %p324 = scmp.ne.s32.totalorder %s313, %s314
    %p325 = scmp.eq.s32.totalorder %s24, 0
    %p326 = por %p324, %p325
    %p327 = scmp.ne.s32.totalorder %s313, %s314
    %p328 = scmp.eq.s32.totalorder %s25, 1
    %p329 = por %p327, %p328
    %p331 = scmp.ne.s32.totalorder %s314, %s330
    %p332 = scmp.eq.s32.totalorder %s25, 0
    %p333 = por %p331, %p332
    %s334 = ssub.s32 %s19, %s26
    %p335 = scmp.eq.s32.totalorder %s334, 0
    %s337 = sadd.s32 %s336, 1
    %s338 = scalar_select %p335, %s336, %s337
    %p341 = pneg %p335
    %p342 = scmp.eq.s32.totalorder %s19, 1
    %p343 = por %p341, %p342
    %p344 = scmp.ne.s32.totalorder %s336, %s339
    %p345 = scmp.eq.s32.totalorder %s19, 0
    %p346 = por %p344, %p345
    %p347 = scmp.ne.s32.totalorder %s336, %s339
    %p348 = scmp.eq.s32.totalorder %s24, 1
    %p349 = por %p347, %p348
    %p350 = scmp.ne.s32.totalorder %s339, %s340
    %p351 = scmp.eq.s32.totalorder %s24, 0
    %p352 = por %p350, %p351
    %p353 = scmp.ne.s32.totalorder %s339, %s340
    %p354 = scmp.eq.s32.totalorder %s25, 1
    %p355 = por %p353, %p354
    %p357 = scmp.ne.s32.totalorder %s340, %s356
    %p358 = scmp.eq.s32.totalorder %s25, 0
    %p359 = por %p357, %p358
    %s361 = sadd.s32 %s360, 1
    %p364 = scmp.eq.s32.totalorder %s19, 1
    %p365 = scmp.ne.s32.totalorder %s360, %s362
    %p366 = scmp.eq.s32.totalorder %s19, 0
    %p367 = por %p365, %p366
    %p368 = scmp.ne.s32.totalorder %s360, %s362
    %p369 = scmp.eq.s32.totalorder %s24, 1
    %p370 = por %p368, %p369
    %p371 = scmp.ne.s32.totalorder %s362, %s363
    %p372 = scmp.eq.s32.totalorder %s24, 0
    %p373 = por %p371, %p372
    %p374 = scmp.ne.s32.totalorder %s362, %s363
    %p375 = scmp.eq.s32.totalorder %s25, 1
    %p376 = por %p374, %p375
    %p378 = scmp.ne.s32.totalorder %s363, %s377
    %p379 = scmp.eq.s32.totalorder %s25, 0
    %p380 = por %p378, %p379
    %p381 = scmp.le.s32.totalorder 1, %s19
    %p382 = scmp.lt.s32.totalorder %s19, 3
    %p383 = pnand %p381, %p382
    %p384 = pneg %p383
    // Predicated region
    $region9: #{transformer_encoder.1} parent=5 // pred_check
      _
    $region10: #{transformer_encoder.1} parent=5 // pred_check_branch
      %386 = sbr.rel (%p383) target = $region12
    $region11: #{transformer_encoder.1} parent=5 // pred_region
      %s387 = ssub.s32 %s19, 1
      // Predicated region
      $region13: #{transformer_encoder.1} parent=11 // pred_check
        %p388 = pneg %p40
      $region14: #{transformer_encoder.1} parent=11 // pred_check_branch
        %390 = sbr.rel (%p388) target = $region16
      $region15: #{transformer_encoder.1} parent=11 // pred_region
        _
      $region16: #{transformer_encoder.1} parent=11 // pred_fallthru
        _
    $region12: #{transformer_encoder.1} parent=5 // pred_fallthru
      _
    %p391 = scmp.lt.s32.totalorder %s19, 2
    // Predicated region
    $region17: #{transformer_encoder.1} parent=5 // pred_check
      %p392 = pneg %p391
    $region18: #{transformer_encoder.1} parent=5 // pred_check_branch
      %394 = sbr.rel (%p392) target = $region20
    $region19: #{transformer_encoder.1} parent=5 // pred_region
      // Predicated region
      $region21: #{transformer_encoder.1} parent=19 // pred_check
        %p395 = pneg %p60
      $region22: #{transformer_encoder.1} parent=19 // pred_check_branch
        %397 = sbr.rel (%p395) target = $region24
      $region23: #{transformer_encoder.1} parent=19 // pred_region
        %p398 = scmp.lt.s32.totalorder %s19, 1
        %s399 = scalar_select %p398, %s19, 1
        %s400 = smul.addr %s399, 4
        %s401 = smul.addr %s400, 4
        %s402 = scalar_lea.vmem %s1, %s401
      $region24: #{transformer_encoder.1} parent=19 // pred_fallthru
        _
      // Predicated region
      $region25: #{transformer_encoder.1} parent=19 // pred_check
        %p403 = pneg %p86
      $region26: #{transformer_encoder.1} parent=19 // pred_check_branch
        %405 = sbr.rel (%p403) target = $region28
      $region27: #{transformer_encoder.1} parent=19 // pred_region
        %p406 = scmp.lt.s32.totalorder %s19, 1
        %s407 = scalar_select %p406, %s19, 1
        %s408 = scalar_lea.vmem %s2, %s407
      $region28: #{transformer_encoder.1} parent=19 // pred_fallthru
        _
      // Predicated region
      $region29: #{transformer_encoder.1} parent=19 // pred_check
        %p409 = pneg %p112
      $region30: #{transformer_encoder.1} parent=19 // pred_check_branch
        %411 = sbr.rel (%p409) target = $region32
      $region31: #{transformer_encoder.1} parent=19 // pred_region
        %p412 = scmp.lt.s32.totalorder %s19, 1
        %s413 = scalar_select %p412, %s19, 1
        %s414 = smul.addr %s413, 4
        %s415 = smul.addr %s414, 4
        %s416 = scalar_lea.vmem %s3, %s415
      $region32: #{transformer_encoder.1} parent=19 // pred_fallthru
        _
      // Predicated region
      $region33: #{transformer_encoder.1} parent=19 // pred_check
        %p417 = pneg %p138
      $region34: #{transformer_encoder.1} parent=19 // pred_check_branch
        %419 = sbr.rel (%p417) target = $region36
      $region35: #{transformer_encoder.1} parent=19 // pred_region
        %p420 = scmp.lt.s32.totalorder %s19, 1
        %s421 = scalar_select %p420, %s19, 1
        %s422 = scalar_lea.vmem %s4, %s421
      $region36: #{transformer_encoder.1} parent=19 // pred_fallthru
        _
      // Predicated region
      $region37: #{transformer_encoder.1} parent=19 // pred_check
        %p423 = pneg %p164
      $region38: #{transformer_encoder.1} parent=19 // pred_check_branch
        %425 = sbr.rel (%p423) target = $region40
      $region39: #{transformer_encoder.1} parent=19 // pred_region
        %p426 = scmp.lt.s32.totalorder %s19, 1
        %s427 = scalar_select %p426, %s19, 1
        %s428 = scalar_lea.vmem %s5, %s427
      $region40: #{transformer_encoder.1} parent=19 // pred_fallthru
        _
      // Predicated region
      $region41: #{transformer_encoder.1} parent=19 // pred_check
        %p429 = pneg %p190
      $region42: #{transformer_encoder.1} parent=19 // pred_check_branch
        %431 = sbr.rel (%p429) target = $region44
      $region43: #{transformer_encoder.1} parent=19 // pred_region
        %p432 = scmp.lt.s32.totalorder %s19, 1
        %s433 = scalar_select %p432, %s19, 1
        %s434 = scalar_lea.vmem %s6, %s433
      $region44: #{transformer_encoder.1} parent=19 // pred_fallthru
        _
      // Predicated region
      $region45: #{transformer_encoder.1} parent=19 // pred_check
        %p435 = pneg %p216
      $region46: #{transformer_encoder.1} parent=19 // pred_check_branch
        %437 = sbr.rel (%p435) target = $region48
      $region47: #{transformer_encoder.1} parent=19 // pred_region
        %p438 = scmp.lt.s32.totalorder %s19, 1
        %s439 = scalar_select %p438, %s19, 1
        %s440 = smul.addr %s439, 4
        %s441 = smul.addr %s440, 4
        %s442 = scalar_lea.vmem %s7, %s441
      $region48: #{transformer_encoder.1} parent=19 // pred_fallthru
        _
      // Predicated region
      $region49: #{transformer_encoder.1} parent=19 // pred_check
        %p443 = pneg %p242
      $region50: #{transformer_encoder.1} parent=19 // pred_check_branch
        %445 = sbr.rel (%p443) target = $region52
      $region51: #{transformer_encoder.1} parent=19 // pred_region
        %p446 = scmp.lt.s32.totalorder %s19, 1
        %s447 = scalar_select %p446, %s19, 1
        %s448 = scalar_lea.vmem %s8, %s447
      $region52: #{transformer_encoder.1} parent=19 // pred_fallthru
        _
      // Predicated region
      $region53: #{transformer_encoder.1} parent=19 // pred_check
        %p449 = pneg %p268
      $region54: #{transformer_encoder.1} parent=19 // pred_check_branch
        %451 = sbr.rel (%p449) target = $region56
      $region55: #{transformer_encoder.1} parent=19 // pred_region
        %p452 = scmp.lt.s32.totalorder %s19, 1
        %s453 = scalar_select %p452, %s19, 1
        %s454 = smul.addr %s453, 8
        %s455 = smul.addr %s454, 4
        %s456 = scalar_lea.vmem %s9, %s455
      $region56: #{transformer_encoder.1} parent=19 // pred_fallthru
        _
      // Predicated region
      $region57: #{transformer_encoder.1} parent=19 // pred_check
        %p457 = pneg %p294
      $region58: #{transformer_encoder.1} parent=19 // pred_check_branch
        %459 = sbr.rel (%p457) target = $region60
      $region59: #{transformer_encoder.1} parent=19 // pred_region
        %p460 = scmp.lt.s32.totalorder %s19, 1
        %s461 = scalar_select %p460, %s19, 1
        %s462 = scalar_lea.vmem %s10, %s461
      $region60: #{transformer_encoder.1} parent=19 // pred_fallthru
        _
      // Predicated region
      $region61: #{transformer_encoder.1} parent=19 // pred_check
        %p463 = pneg %p320
      $region62: #{transformer_encoder.1} parent=19 // pred_check_branch
        %465 = sbr.rel (%p463) target = $region64
      $region63: #{transformer_encoder.1} parent=19 // pred_region
        %p466 = scmp.lt.s32.totalorder %s19, 1
        %s467 = scalar_select %p466, %s19, 1
        %s468 = scalar_lea.vmem %s11, %s467
      $region64: #{transformer_encoder.1} parent=19 // pred_fallthru
        _
      // Predicated region
      $region65: #{transformer_encoder.1} parent=19 // pred_check
        %p469 = pneg %p346
      $region66: #{transformer_encoder.1} parent=19 // pred_check_branch
        %471 = sbr.rel (%p469) target = $region68
      $region67: #{transformer_encoder.1} parent=19 // pred_region
        %p472 = scmp.lt.s32.totalorder %s19, 1
        %s473 = scalar_select %p472, %s19, 1
        %s474 = scalar_lea.vmem %s12, %s473
      $region68: #{transformer_encoder.1} parent=19 // pred_fallthru
        _
    $region20: #{transformer_encoder.1} parent=5 // pred_fallthru
      _
    %p475 = scmp.le.s32.totalorder 1, %s19
    %p476 = scmp.lt.s32.totalorder %s19, 3
    %p477 = pnand %p475, %p476
    %p478 = pneg %p477
    // Predicated region
    $region69: #{transformer_encoder.1} parent=5 // pred_check
      _
    $region70: #{transformer_encoder.1} parent=5 // pred_check_branch
      %480 = sbr.rel (%p477) target = $region72
    $region71: #{transformer_encoder.1} parent=5 // pred_region
      %s481 = ssub.s32 %s19, 1
      %p482 = pneg %p40
      %p483 = pneg %p37
      %p484 = scmp.lt.s32.totalorder %s24, 1
      %s485 = scalar_select %p484, %s24, 1
      %s486 = smul.addr %s485, 4
      %s487 = smul.addr %s486, 4
      %s488 = scalar_lea.vmem %s1, %s487
      %p489 = pneg %p66
      %p490 = pneg %p63
      %p491 = scmp.lt.s32.totalorder %s24, 1
      %s492 = scalar_select %p491, %s24, 1
      %s493 = scalar_lea.vmem %s2, %s492
      %p494 = pneg %p92
      %p495 = pneg %p89
      %p496 = scmp.lt.s32.totalorder %s24, 1
      %s497 = scalar_select %p496, %s24, 1
      %s498 = smul.addr %s497, 4
      %s499 = smul.addr %s498, 4
      %s500 = scalar_lea.vmem %s3, %s499
      %p501 = pneg %p118
      %p502 = pneg %p115
      %p503 = scmp.lt.s32.totalorder %s24, 1
      %s504 = scalar_select %p503, %s24, 1
      %s505 = scalar_lea.vmem %s4, %s504
      %p506 = pneg %p144
      %p507 = pneg %p141
      %p508 = scmp.lt.s32.totalorder %s24, 1
      %s509 = scalar_select %p508, %s24, 1
      %s510 = scalar_lea.vmem %s5, %s509
      %p511 = pneg %p170
      %p512 = pneg %p167
      %p513 = scmp.lt.s32.totalorder %s24, 1
      %s514 = scalar_select %p513, %s24, 1
      %s515 = scalar_lea.vmem %s6, %s514
      %p516 = pneg %p196
      %p517 = pneg %p193
      %p518 = scmp.lt.s32.totalorder %s24, 1
      %s519 = scalar_select %p518, %s24, 1
      %s520 = smul.addr %s519, 4
      %s521 = smul.addr %s520, 4
      %s522 = scalar_lea.vmem %s7, %s521
      %p523 = pneg %p222
      %p524 = pneg %p219
      %p525 = scmp.lt.s32.totalorder %s24, 1
      %s526 = scalar_select %p525, %s24, 1
      %s527 = scalar_lea.vmem %s8, %s526
      %p528 = pneg %p248
      %p529 = pneg %p245
      %p530 = scmp.lt.s32.totalorder %s24, 1
      %s531 = scalar_select %p530, %s24, 1
      %s532 = smul.addr %s531, 8
      %s533 = smul.addr %s532, 4
      %s534 = scalar_lea.vmem %s9, %s533
      %p535 = pneg %p274
      %p536 = pneg %p271
      %p537 = scmp.lt.s32.totalorder %s24, 1
      %s538 = scalar_select %p537, %s24, 1
      %s539 = scalar_lea.vmem %s10, %s538
      %p540 = pneg %p300
      %p541 = pneg %p297
      %p542 = scmp.lt.s32.totalorder %s24, 1
      %s543 = scalar_select %p542, %s24, 1
      %s544 = scalar_lea.vmem %s11, %s543
      %p545 = pneg %p326
      %p546 = pneg %p323
      %p547 = scmp.lt.s32.totalorder %s24, 1
      %s548 = scalar_select %p547, %s24, 1
      %s549 = scalar_lea.vmem %s12, %s548
      %p550 = pneg %p352
      %p551 = pneg %p349
      %p552 = pneg %p373
      %p553 = pneg %p370
      %p554 = scmp.lt.s32.totalorder %s24, 1
      %s555 = scalar_select %p554, %s24, 1
      %s556 = smul.addr %s555, 4
      %s557 = smul.addr %s556, 4
      %s558 = scalar_lea.vmem %s1, %s557
      %p559 = scmp.lt.s32.totalorder %s24, 1
      %s560 = scalar_select %p559, %s24, 1
      %s561 = scalar_lea.vmem %s2, %s560
      %p562 = scmp.lt.s32.totalorder %s24, 1
      %s563 = scalar_select %p562, %s24, 1
      %s564 = smul.addr %s563, 4
      %s565 = smul.addr %s564, 4
      %s566 = scalar_lea.vmem %s3, %s565
      %p567 = scmp.lt.s32.totalorder %s24, 1
      %s568 = scalar_select %p567, %s24, 1
      %s569 = scalar_lea.vmem %s4, %s568
      %p570 = scmp.lt.s32.totalorder %s24, 1
      %s571 = scalar_select %p570, %s24, 1
      %s572 = scalar_lea.vmem %s5, %s571
      %p573 = scmp.lt.s32.totalorder %s24, 1
      %s574 = scalar_select %p573, %s24, 1
      %s575 = scalar_lea.vmem %s6, %s574
      %p576 = scmp.lt.s32.totalorder %s24, 1
      %s577 = scalar_select %p576, %s24, 1
      %s578 = smul.addr %s577, 4
      %s579 = smul.addr %s578, 4
      %s580 = scalar_lea.vmem %s7, %s579
      %p581 = scmp.lt.s32.totalorder %s24, 1
      %s582 = scalar_select %p581, %s24, 1
      %s583 = scalar_lea.vmem %s8, %s582
      %p584 = scmp.lt.s32.totalorder %s24, 1
      %s585 = scalar_select %p584, %s24, 1
      %s586 = smul.addr %s585, 8
      %s587 = smul.addr %s586, 4
      %s588 = scalar_lea.vmem %s9, %s587
      %p589 = scmp.lt.s32.totalorder %s24, 1
      %s590 = scalar_select %p589, %s24, 1
      %s591 = scalar_lea.vmem %s10, %s590
      %p592 = scmp.lt.s32.totalorder %s24, 1
      %s593 = scalar_select %p592, %s24, 1
      %s594 = scalar_lea.vmem %s11, %s593
      %p595 = scmp.lt.s32.totalorder %s24, 1
      %s596 = scalar_select %p595, %s24, 1
      %s597 = scalar_lea.vmem %s12, %s596
      %p599 = scmp.eq.s32.totalorder %s24, 0
      // Predicated region
      $region73: #{transformer_encoder.1} parent=71 // pred_check
        %p600 = pneg %p599
      $region74: #{transformer_encoder.1} parent=71 // pred_check_branch
        %602 = sbr.rel (%p600) target = $region76
      $region75: #{transformer_encoder.1} parent=71 // pred_region
        %v603 = vld [vmem:[%s0] sm:$0xff]
        %v604 = vld [vmem:[%s0 + $0x8] sm:$0xff]
        %vm605 = vcmask 261120
        %606 = vst.msk [vmem:[#allocation2] sm:$0xff] %vm605, %v603
        %607 = vst.msk [vmem:[#allocation2 + $0x8] sm:$0xff] %vm605, %v604
      $region76: #{transformer_encoder.1} parent=71 // pred_fallthru
        _
      %v608 = vld [vmem:[#allocation2] sm:$0xff]
      %v609 = vld [vmem:[#allocation2 + $0x8] sm:$0xff]
      %v610 = vpack.c.bf16 %v609, %v608
      %v611 = vld [vmem:[%s558] sm:$0xf]
      %v612 = vld [vmem:[%s558 + $0x4] sm:$0xf]
      %v613 = vld [vmem:[%s558 + $0x8] sm:$0xf]
      %v614 = vld [vmem:[%s558 + $0xc] sm:$0xf]
      %v615 = vld [vmem:[%s561] sm:$0x1]
      %v617 = vlaneseq
      %v618 = vshrl.u32 %v617, 7
      %v619 = vsub.s32 0, %v618
      %v620 = vrot.slane %v615, %v619
      %v626 = vunpack.c.l.b16 %v611
      %v627 = vunpack.c.l.b16 %v612
      %v628 = vunpack.c.l.b16 %v613
      %v629 = vunpack.c.l.b16 %v614
      %v630 = vpack.c.b16 %v627, %v626
      %v631 = vpack.c.b16 %v629, %v628
      %vm634 = vcmask 261120
      %v636 = vsel %vm634, %v610, 0
      %638 = vmatprep.subr.bf16.mxu0 0
      %639 = vmatpush1.bf16.msra.mxu0 0
      %640 = vmatprep.subr.bf16.mxu0 0
      %641 = vmatpush1.bf16.msra.mxu0 0
      %642 = vmatprep.subr.bf16.mxu0 0
      %643 = vmatpush1.bf16.msra.mxu0 0
      %644 = vmatprep.subr.bf16.mxu0 0
      %645 = vmatpush1.bf16.msra.mxu0 0
      %646 = vmatprep.subr.bf16.mxu0 0
      %647 = vmatpush1.bf16.msra.mxu0 0
      %648 = vmatprep.subr.bf16.mxu0 0
      %649 = vmatpush1.bf16.msra.mxu0 0
      %650 = vmatprep.subr.bf16.mxu0 0
      %651 = vmatpush1.bf16.msra.mxu0 %v631
      %652 = vmatprep.subr.bf16.mxu0 0
      %653 = vmatpush1.bf16.msra.mxu0 %v630
      %654 = vmatprep.subr.bf16.mxu0 0
      %655 = vmatpush2.bf16.msra.mxu0 0
      %656 = vmatprep.subr.bf16.mxu0 0
      %657 = vmatpush2.bf16.msra.mxu0 0
      %658 = vmatprep.subr.bf16.mxu0 0
      %659 = vmatpush2.bf16.msra.mxu0 0
      %660 = vmatprep.subr.bf16.mxu0 0
      %661 = vmatpush2.bf16.msra.mxu0 0
      %662 = vmatprep.subr.bf16.mxu0 0
      %663 = vmatpush2.bf16.msra.mxu0 0
      %664 = vmatprep.subr.bf16.mxu0 0
      %665 = vmatpush2.bf16.msra.mxu0 0
      %666 = vmatprep.subr.bf16.mxu0 0
      %667 = vmatpush2.bf16.msra.mxu0 0
      %668 = vmatprep.subr.bf16.mxu0 0
      %669 = vmatpush2.bf16.msra.mxu0 0
      %670 = vmatprep.mubr.bf16.mxu0 0
      %671 = vmatmul.mubr.bf16.gmra.mxu0 %v636
      %v672 = vpop.f32.mrf.mxu0
      %v673 = vadd.f32 %v620, %v672
      %v674 = vpop.f32.mrf.mxu0
      %v675 = vpop.f32.mrf.mxu0
      %v676 = vadd.f32 %v620, %v675
      %v677 = vpop.f32.mrf.mxu0
      %678 = vdwg.mxu0
      %vm679 = vcmask 785408
      %680 = vst.msk [vmem:[#allocation3] sm:$0xff] %vm679, %v673
      %681 = vst.msk [vmem:[#allocation3 + $0x8] sm:$0xff] %vm679, %v676
      %v682 = vld [vmem:[#allocation3] sm:$0xff]
      %v683 = vpack.c.bf16 %v682, %v682
      %685 = vrot.lane.b32.xlu0 %v683, 96
      %v686 = vpop.permute.xlu0 %685
      %vm687 = vcmask 64512
      %v689 = vsel %vm687, %v683, 0
      %v692 = vsel %vm687, %v686, 0
      %694 = vmatprep.subr.bf16.mxu0 0
      %695 = vmatpush1.bf16.xpose.msra.mxu0 0
      %696 = vmatprep.subr.bf16.mxu0 0
      %697 = vmatpush1.bf16.xpose.msra.mxu0 0
      %698 = vmatprep.subr.bf16.mxu0 0
      %699 = vmatpush1.bf16.xpose.msra.mxu0 0
      %700 = vmatprep.subr.bf16.mxu0 0
      %701 = vmatpush1.bf16.xpose.msra.mxu0 0
      %702 = vmatprep.subr.bf16.mxu0 0
      %703 = vmatpush1.bf16.xpose.msra.mxu0 0
      %704 = vmatprep.subr.bf16.mxu0 0
      %705 = vmatpush1.bf16.xpose.msra.mxu0 0
      %706 = vmatprep.subr.bf16.mxu0 0
      %707 = vmatpush1.bf16.xpose.msra.mxu0 0
      %708 = vmatprep.subr.bf16.mxu0 0
      %709 = vmatpush1.bf16.xpose.msra.mxu0 %v692
      %710 = vmatprep.subr.bf16.mxu0 0
      %711 = vmatpush2.bf16.xpose.msra.mxu0 0
      %712 = vmatprep.subr.bf16.mxu0 0
      %713 = vmatpush2.bf16.xpose.msra.mxu0 0
      %714 = vmatprep.subr.bf16.mxu0 0
      %715 = vmatpush2.bf16.xpose.msra.mxu0 0
      %716 = vmatprep.subr.bf16.mxu0 0
      %717 = vmatpush2.bf16.xpose.msra.mxu0 0
      %718 = vmatprep.subr.bf16.mxu0 0
      %719 = vmatpush2.bf16.xpose.msra.mxu0 0
      %720 = vmatprep.subr.bf16.mxu0 0
      %721 = vmatpush2.bf16.xpose.msra.mxu0 0
      %722 = vmatprep.subr.bf16.mxu0 0
      %723 = vmatpush2.bf16.xpose.msra.mxu0 0
      %724 = vmatprep.subr.bf16.mxu0 0
      %725 = vmatpush2.bf16.xpose.msra.mxu0 0
      %726 = vmatprep.mubr.bf16.mxu0 0
      %727 = vmatmul.mubr.bf16.gmra.mxu0 %v689
      %v728 = vpop.f32.mrf.mxu0
      %v729 = vadd.f32 0.0, %v728
      %v730 = vpop.f32.mrf.mxu0
      %v731 = vpop.f32.mrf.mxu0
      %v732 = vpop.f32.mrf.mxu0
      %733 = vdwg.mxu0
      %v734 = vmul.f32 %v729, 0.35355338
      %v735 = vsel %vm687, %v734, -inf
      %736 = vmax.xlane.f32.xlu0 %v735
      %v737 = vpop.xlane.xlu0 %736
      %v738 = vsub.f32 %v734, %v737
      %v739 = vmul.f32 %v738, 1.442695
      %v740 = vpow.pop %v739
      %v741 = vsel %vm687, %v740, 0.0
      %742 = vadd.xlane.f32.xlu0 %v741
      %v743 = vpop.xlane.xlu0 %742
      %v744 = vrcp.pop %v743
      %v745 = vmul.f32 %v740, %v744
      %v746 = vpack.c.bf16 %v745, %v745
      %747 = vrot.lane.b32.xlu0 %v683, 64
      %v748 = vpop.permute.xlu0 %747
      %v750 = vsel %vm687, %v746, 0
      %vm752 = vcmask 1043456
      %v754 = vsel %vm752, %v748, 0
      %756 = vmatprep.subr.bf16.mxu0 0
      %757 = vmatpush1.bf16.msra.mxu0 0
      %758 = vmatprep.subr.bf16.mxu0 0
      %759 = vmatpush1.bf16.msra.mxu0 0
      %760 = vmatprep.subr.bf16.mxu0 0
      %761 = vmatpush1.bf16.msra.mxu0 0
      %762 = vmatprep.subr.bf16.mxu0 0
      %763 = vmatpush1.bf16.msra.mxu0 0
      %764 = vmatprep.subr.bf16.mxu0 0
      %765 = vmatpush1.bf16.msra.mxu0 0
      %766 = vmatprep.subr.bf16.mxu0 0
      %767 = vmatpush1.bf16.msra.mxu0 0
      %768 = vmatprep.subr.bf16.mxu0 0
      %769 = vmatpush1.bf16.msra.mxu0 0
      %770 = vmatprep.subr.bf16.mxu0 0
      %771 = vmatpush1.bf16.msra.mxu0 %v754
      %772 = vmatprep.subr.bf16.mxu0 0
      %773 = vmatpush2.bf16.msra.mxu0 0
      %774 = vmatprep.subr.bf16.mxu0 0
      %775 = vmatpush2.bf16.msra.mxu0 0
      %776 = vmatprep.subr.bf16.mxu0 0
      %777 = vmatpush2.bf16.msra.mxu0 0
      %778 = vmatprep.subr.bf16.mxu0 0
      %779 = vmatpush2.bf16.msra.mxu0 0
      %780 = vmatprep.subr.bf16.mxu0 0
      %781 = vmatpush2.bf16.msra.mxu0 0
      %782 = vmatprep.subr.bf16.mxu0 0
      %783 = vmatpush2.bf16.msra.mxu0 0
      %784 = vmatprep.subr.bf16.mxu0 0
      %785 = vmatpush2.bf16.msra.mxu0 0
      %786 = vmatprep.subr.bf16.mxu0 0
      %787 = vmatpush2.bf16.msra.mxu0 0
      %788 = vmatprep.mubr.bf16.mxu0 0
      %789 = vmatmul.mubr.bf16.gmra.mxu0 %v750
      %v790 = vpop.f32.mrf.mxu0
      %v791 = vadd.f32 0.0, %v790
      %v792 = vpop.f32.mrf.mxu0
      %v793 = vpop.f32.mrf.mxu0
      %v794 = vpop.f32.mrf.mxu0
      %795 = vdwg.mxu0
      %796 = vst.msk [vmem:[#allocation4] sm:$0xff] %vm687, %v791
      %797 = vrot.lane.b32.xlu0 %v683, 120
      %v798 = vpop.permute.xlu0 %797
      %799 = vrot.lane.b32.xlu0 %v683, 88
      %v800 = vpop.permute.xlu0 %799
      %v802 = vsel %vm687, %v798, 0
      %v805 = vsel %vm687, %v800, 0
      %807 = vmatprep.subr.bf16.mxu0 0
      %808 = vmatpush1.bf16.xpose.msra.mxu0 0
      %809 = vmatprep.subr.bf16.mxu0 0
      %810 = vmatpush1.bf16.xpose.msra.mxu0 0
      %811 = vmatprep.subr.bf16.mxu0 0
      %812 = vmatpush1.bf16.xpose.msra.mxu0 0
      %813 = vmatprep.subr.bf16.mxu0 0
      %814 = vmatpush1.bf16.xpose.msra.mxu0 0
      %815 = vmatprep.subr.bf16.mxu0 0
      %816 = vmatpush1.bf16.xpose.msra.mxu0 0
      %817 = vmatprep.subr.bf16.mxu0 0
      %818 = vmatpush1.bf16.xpose.msra.mxu0 0
      %819 = vmatprep.subr.bf16.mxu0 0
      %820 = vmatpush1.bf16.xpose.msra.mxu0 0
      %821 = vmatprep.subr.bf16.mxu0 0
      %822 = vmatpush1.bf16.xpose.msra.mxu0 %v805
      %823 = vmatprep.subr.bf16.mxu0 0
      %824 = vmatpush2.bf16.xpose.msra.mxu0 0
      %825 = vmatprep.subr.bf16.mxu0 0
      %826 = vmatpush2.bf16.xpose.msra.mxu0 0
      %827 = vmatprep.subr.bf16.mxu0 0
      %828 = vmatpush2.bf16.xpose.msra.mxu0 0
      %829 = vmatprep.subr.bf16.mxu0 0
      %830 = vmatpush2.bf16.xpose.msra.mxu0 0
      %831 = vmatprep.subr.bf16.mxu0 0
      %832 = vmatpush2.bf16.xpose.msra.mxu0 0
      %833 = vmatprep.subr.bf16.mxu0 0
      %834 = vmatpush2.bf16.xpose.msra.mxu0 0
      %835 = vmatprep.subr.bf16.mxu0 0
      %836 = vmatpush2.bf16.xpose.msra.mxu0 0
      %837 = vmatprep.subr.bf16.mxu0 0
      %838 = vmatpush2.bf16.xpose.msra.mxu0 0
      %839 = vmatprep.mubr.bf16.mxu0 0
      %840 = vmatmul.mubr.bf16.gmra.mxu0 %v802
      %v841 = vpop.f32.mrf.mxu0
      %v842 = vadd.f32 0.0, %v841
      %v843 = vpop.f32.mrf.mxu0
      %v844 = vpop.f32.mrf.mxu0
      %v845 = vpop.f32.mrf.mxu0
      %846 = vdwg.mxu0
      %v847 = vmul.f32 %v842, 0.35355338
      %v848 = vsel %vm687, %v847, -inf
      %849 = vmax.xlane.f32.xlu0 %v848
      %v850 = vpop.xlane.xlu0 %849
      %v851 = vsub.f32 %v847, %v850
      %v852 = vmul.f32 %v851, 1.442695
      %v853 = vpow.pop %v852
      %v854 = vsel %vm687, %v853, 0.0
      %855 = vadd.xlane.f32.xlu0 %v854
      %v856 = vpop.xlane.xlu0 %855
      %v857 = vrcp.pop %v856
      %v858 = vmul.f32 %v853, %v857
      %v859 = vpack.c.bf16 %v858, %v858
      %860 = vrot.lane.b32.xlu0 %v683, 56
      %v861 = vpop.permute.xlu0 %860
      %v863 = vsel %vm687, %v859, 0
      %v866 = vsel %vm752, %v861, 0
      %868 = vmatprep.subr.bf16.mxu0 0
      %869 = vmatpush1.bf16.msra.mxu0 0
      %870 = vmatprep.subr.bf16.mxu0 0
      %871 = vmatpush1.bf16.msra.mxu0 0
      %872 = vmatprep.subr.bf16.mxu0 0
      %873 = vmatpush1.bf16.msra.mxu0 0
      %874 = vmatprep.subr.bf16.mxu0 0
      %875 = vmatpush1.bf16.msra.mxu0 0
      %876 = vmatprep.subr.bf16.mxu0 0
      %877 = vmatpush1.bf16.msra.mxu0 0
      %878 = vmatprep.subr.bf16.mxu0 0
      %879 = vmatpush1.bf16.msra.mxu0 0
      %880 = vmatprep.subr.bf16.mxu0 0
      %881 = vmatpush1.bf16.msra.mxu0 0
      %882 = vmatprep.subr.bf16.mxu0 0
      %883 = vmatpush1.bf16.msra.mxu0 %v866
      %884 = vmatprep.subr.bf16.mxu0 0
      %885 = vmatpush2.bf16.msra.mxu0 0
      %886 = vmatprep.subr.bf16.mxu0 0
      %887 = vmatpush2.bf16.msra.mxu0 0
      %888 = vmatprep.subr.bf16.mxu0 0
      %889 = vmatpush2.bf16.msra.mxu0 0
      %890 = vmatprep.subr.bf16.mxu0 0
      %891 = vmatpush2.bf16.msra.mxu0 0
      %892 = vmatprep.subr.bf16.mxu0 0
      %893 = vmatpush2.bf16.msra.mxu0 0
      %894 = vmatprep.subr.bf16.mxu0 0
      %895 = vmatpush2.bf16.msra.mxu0 0
      %896 = vmatprep.subr.bf16.mxu0 0
      %897 = vmatpush2.bf16.msra.mxu0 0
      %898 = vmatprep.subr.bf16.mxu0 0
      %899 = vmatpush2.bf16.msra.mxu0 0
      %900 = vmatprep.mubr.bf16.mxu0 0
      %901 = vmatmul.mubr.bf16.gmra.mxu0 %v863
      %v902 = vpop.f32.mrf.mxu0
      %v903 = vadd.f32 0.0, %v902
      %v904 = vpop.f32.mrf.mxu0
      %v905 = vpop.f32.mrf.mxu0
      %v906 = vpop.f32.mrf.mxu0
      %907 = vdwg.mxu0
      %909 = vrot.lane.b32.xlu0 %v903, 8
      %v910 = vpop.permute.xlu0 %909
      %vm912 = vcmask 130112
      %913 = vst.msk [vmem:[#allocation4] sm:$0xff] %vm912, %v910
      %914 = vrot.lane.b32.xlu0 %v683, 112
      %v915 = vpop.permute.xlu0 %914
      %916 = vrot.lane.b32.xlu0 %v683, 80
      %v917 = vpop.permute.xlu0 %916
      %v919 = vsel %vm687, %v915, 0
      %v922 = vsel %vm687, %v917, 0
      %924 = vmatprep.subr.bf16.mxu0 0
      %925 = vmatpush1.bf16.xpose.msra.mxu0 0
      %926 = vmatprep.subr.bf16.mxu0 0
      %927 = vmatpush1.bf16.xpose.msra.mxu0 0
      %928 = vmatprep.subr.bf16.mxu0 0
      %929 = vmatpush1.bf16.xpose.msra.mxu0 0
      %930 = vmatprep.subr.bf16.mxu0 0
      %931 = vmatpush1.bf16.xpose.msra.mxu0 0
      %932 = vmatprep.subr.bf16.mxu0 0
      %933 = vmatpush1.bf16.xpose.msra.mxu0 0
      %934 = vmatprep.subr.bf16.mxu0 0
      %935 = vmatpush1.bf16.xpose.msra.mxu0 0
      %936 = vmatprep.subr.bf16.mxu0 0
      %937 = vmatpush1.bf16.xpose.msra.mxu0 0
      %938 = vmatprep.subr.bf16.mxu0 0
      %939 = vmatpush1.bf16.xpose.msra.mxu0 %v922
      %940 = vmatprep.subr.bf16.mxu0 0
      %941 = vmatpush2.bf16.xpose.msra.mxu0 0
      %942 = vmatprep.subr.bf16.mxu0 0
      %943 = vmatpush2.bf16.xpose.msra.mxu0 0
      %944 = vmatprep.subr.bf16.mxu0 0
      %945 = vmatpush2.bf16.xpose.msra.mxu0 0
      %946 = vmatprep.subr.bf16.mxu0 0
      %947 = vmatpush2.bf16.xpose.msra.mxu0 0
      %948 = vmatprep.subr.bf16.mxu0 0
      %949 = vmatpush2.bf16.xpose.msra.mxu0 0
      %950 = vmatprep.subr.bf16.mxu0 0
      %951 = vmatpush2.bf16.xpose.msra.mxu0 0
      %952 = vmatprep.subr.bf16.mxu0 0
      %953 = vmatpush2.bf16.xpose.msra.mxu0 0
      %954 = vmatprep.subr.bf16.mxu0 0
      %955 = vmatpush2.bf16.xpose.msra.mxu0 0
      %956 = vmatprep.mubr.bf16.mxu0 0
      %957 = vmatmul.mubr.bf16.gmra.mxu0 %v919
      %v958 = vpop.f32.mrf.mxu0
      %v959 = vadd.f32 0.0, %v958
      %v960 = vpop.f32.mrf.mxu0
      %v961 = vpop.f32.mrf.mxu0
      %v962 = vpop.f32.mrf.mxu0
      %963 = vdwg.mxu0
      %v964 = vmul.f32 %v959, 0.35355338
      %v965 = vsel %vm687, %v964, -inf
      %966 = vmax.xlane.f32.xlu0 %v965
      %v967 = vpop.xlane.xlu0 %966
      %v968 = vsub.f32 %v964, %v967
      %v969 = vmul.f32 %v968, 1.442695
      %v970 = vpow.pop %v969
      %v971 = vsel %vm687, %v970, 0.0
      %972 = vadd.xlane.f32.xlu0 %v971
      %v973 = vpop.xlane.xlu0 %972
      %v974 = vrcp.pop %v973
      %v975 = vmul.f32 %v970, %v974
      %v976 = vpack.c.bf16 %v975, %v975
      %977 = vrot.lane.b32.xlu0 %v683, 48
      %v978 = vpop.permute.xlu0 %977
      %v980 = vsel %vm687, %v976, 0
      %v983 = vsel %vm752, %v978, 0
      %985 = vmatprep.subr.bf16.mxu0 0
      %986 = vmatpush1.bf16.msra.mxu0 0
      %987 = vmatprep.subr.bf16.mxu0 0
      %988 = vmatpush1.bf16.msra.mxu0 0
      %989 = vmatprep.subr.bf16.mxu0 0
      %990 = vmatpush1.bf16.msra.mxu0 0
      %991 = vmatprep.subr.bf16.mxu0 0
      %992 = vmatpush1.bf16.msra.mxu0 0
      %993 = vmatprep.subr.bf16.mxu0 0
      %994 = vmatpush1.bf16.msra.mxu0 0
      %995 = vmatprep.subr.bf16.mxu0 0
      %996 = vmatpush1.bf16.msra.mxu0 0
      %997 = vmatprep.subr.bf16.mxu0 0
      %998 = vmatpush1.bf16.msra.mxu0 0
      %999 = vmatprep.subr.bf16.mxu0 0
      %1000 = vmatpush1.bf16.msra.mxu0 %v983
      %1001 = vmatprep.subr.bf16.mxu0 0
      %1002 = vmatpush2.bf16.msra.mxu0 0
      %1003 = vmatprep.subr.bf16.mxu0 0
      %1004 = vmatpush2.bf16.msra.mxu0 0
      %1005 = vmatprep.subr.bf16.mxu0 0
      %1006 = vmatpush2.bf16.msra.mxu0 0
      %1007 = vmatprep.subr.bf16.mxu0 0
      %1008 = vmatpush2.bf16.msra.mxu0 0
      %1009 = vmatprep.subr.bf16.mxu0 0
      %1010 = vmatpush2.bf16.msra.mxu0 0
      %1011 = vmatprep.subr.bf16.mxu0 0
      %1012 = vmatpush2.bf16.msra.mxu0 0
      %1013 = vmatprep.subr.bf16.mxu0 0
      %1014 = vmatpush2.bf16.msra.mxu0 0
      %1015 = vmatprep.subr.bf16.mxu0 0
      %1016 = vmatpush2.bf16.msra.mxu0 0
      %1017 = vmatprep.mubr.bf16.mxu0 0
      %1018 = vmatmul.mubr.bf16.gmra.mxu0 %v980
      %v1019 = vpop.f32.mrf.mxu0
      %v1020 = vadd.f32 0.0, %v1019
      %v1021 = vpop.f32.mrf.mxu0
      %v1022 = vpop.f32.mrf.mxu0
      %v1023 = vpop.f32.mrf.mxu0
      %1024 = vdwg.mxu0
      %1026 = vrot.lane.b32.xlu0 %v1020, 16
      %v1027 = vpop.permute.xlu0 %1026
      %vm1029 = vcmask 195712
      %1030 = vst.msk [vmem:[#allocation4] sm:$0xff] %vm1029, %v1027
      %1031 = vrot.lane.b32.xlu0 %v683, 104
      %v1032 = vpop.permute.xlu0 %1031
      %1033 = vrot.lane.b32.xlu0 %v683, 72
      %v1034 = vpop.permute.xlu0 %1033
      %v1036 = vsel %vm687, %v1032, 0
      %v1039 = vsel %vm687, %v1034, 0
      %1041 = vmatprep.subr.bf16.mxu0 0
      %1042 = vmatpush1.bf16.xpose.msra.mxu0 0
      %1043 = vmatprep.subr.bf16.mxu0 0
      %1044 = vmatpush1.bf16.xpose.msra.mxu0 0
      %1045 = vmatprep.subr.bf16.mxu0 0
      %1046 = vmatpush1.bf16.xpose.msra.mxu0 0
      %1047 = vmatprep.subr.bf16.mxu0 0
      %1048 = vmatpush1.bf16.xpose.msra.mxu0 0
      %1049 = vmatprep.subr.bf16.mxu0 0
      %1050 = vmatpush1.bf16.xpose.msra.mxu0 0
      %1051 = vmatprep.subr.bf16.mxu0 0
      %1052 = vmatpush1.bf16.xpose.msra.mxu0 0
      %1053 = vmatprep.subr.bf16.mxu0 0
      %1054 = vmatpush1.bf16.xpose.msra.mxu0 0
      %1055 = vmatprep.subr.bf16.mxu0 0
      %1056 = vmatpush1.bf16.xpose.msra.mxu0 %v1039
      %1057 = vmatprep.subr.bf16.mxu0 0
      %1058 = vmatpush2.bf16.xpose.msra.mxu0 0
      %1059 = vmatprep.subr.bf16.mxu0 0
      %1060 = vmatpush2.bf16.xpose.msra.mxu0 0
      %1061 = vmatprep.subr.bf16.mxu0 0
      %1062 = vmatpush2.bf16.xpose.msra.mxu0 0
      %1063 = vmatprep.subr.bf16.mxu0 0
      %1064 = vmatpush2.bf16.xpose.msra.mxu0 0
      %1065 = vmatprep.subr.bf16.mxu0 0
      %1066 = vmatpush2.bf16.xpose.msra.mxu0 0
      %1067 = vmatprep.subr.bf16.mxu0 0
      %1068 = vmatpush2.bf16.xpose.msra.mxu0 0
      %1069 = vmatprep.subr.bf16.mxu0 0
      %1070 = vmatpush2.bf16.xpose.msra.mxu0 0
      %1071 = vmatprep.subr.bf16.mxu0 0
      %1072 = vmatpush2.bf16.xpose.msra.mxu0 0
      %1073 = vmatprep.mubr.bf16.mxu0 0
      %1074 = vmatmul.mubr.bf16.gmra.mxu0 %v1036
      %v1075 = vpop.f32.mrf.mxu0
      %v1076 = vadd.f32 0.0, %v1075
      %v1077 = vpop.f32.mrf.mxu0
      %v1078 = vpop.f32.mrf.mxu0
      %v1079 = vpop.f32.mrf.mxu0
      %1080 = vdwg.mxu0
      %v1081 = vmul.f32 %v1076, 0.35355338
      %v1082 = vsel %vm687, %v1081, -inf
      %1083 = vmax.xlane.f32.xlu0 %v1082
      %v1084 = vpop.xlane.xlu0 %1083
      %v1085 = vsub.f32 %v1081, %v1084
      %v1086 = vmul.f32 %v1085, 1.442695
      %v1087 = vpow.pop %v1086
      %v1088 = vsel %vm687, %v1087, 0.0
      %1089 = vadd.xlane.f32.xlu0 %v1088
      %v1090 = vpop.xlane.xlu0 %1089
      %v1091 = vrcp.pop %v1090
      %v1092 = vmul.f32 %v1087, %v1091
      %v1093 = vpack.c.bf16 %v1092, %v1092
      %1094 = vrot.lane.b32.xlu0 %v683, 40
      %v1095 = vpop.permute.xlu0 %1094
      %v1097 = vsel %vm687, %v1093, 0
      %v1100 = vsel %vm752, %v1095, 0
      %1102 = vmatprep.subr.bf16.mxu0 0
      %1103 = vmatpush1.bf16.msra.mxu0 0
      %1104 = vmatprep.subr.bf16.mxu0 0
      %1105 = vmatpush1.bf16.msra.mxu0 0
      %1106 = vmatprep.subr.bf16.mxu0 0
      %1107 = vmatpush1.bf16.msra.mxu0 0
      %1108 = vmatprep.subr.bf16.mxu0 0
      %1109 = vmatpush1.bf16.msra.mxu0 0
      %1110 = vmatprep.subr.bf16.mxu0 0
      %1111 = vmatpush1.bf16.msra.mxu0 0
      %1112 = vmatprep.subr.bf16.mxu0 0
      %1113 = vmatpush1.bf16.msra.mxu0 0
      %1114 = vmatprep.subr.bf16.mxu0 0
      %1115 = vmatpush1.bf16.msra.mxu0 0
      %1116 = vmatprep.subr.bf16.mxu0 0
      %1117 = vmatpush1.bf16.msra.mxu0 %v1100
      %1118 = vmatprep.subr.bf16.mxu0 0
      %1119 = vmatpush2.bf16.msra.mxu0 0
      %1120 = vmatprep.subr.bf16.mxu0 0
      %1121 = vmatpush2.bf16.msra.mxu0 0
      %1122 = vmatprep.subr.bf16.mxu0 0
      %1123 = vmatpush2.bf16.msra.mxu0 0
      %1124 = vmatprep.subr.bf16.mxu0 0
      %1125 = vmatpush2.bf16.msra.mxu0 0
      %1126 = vmatprep.subr.bf16.mxu0 0
      %1127 = vmatpush2.bf16.msra.mxu0 0
      %1128 = vmatprep.subr.bf16.mxu0 0
      %1129 = vmatpush2.bf16.msra.mxu0 0
      %1130 = vmatprep.subr.bf16.mxu0 0
      %1131 = vmatpush2.bf16.msra.mxu0 0
      %1132 = vmatprep.subr.bf16.mxu0 0
      %1133 = vmatpush2.bf16.msra.mxu0 0
      %1134 = vmatprep.mubr.bf16.mxu0 0
      %1135 = vmatmul.mubr.bf16.gmra.mxu0 %v1097
      %v1136 = vpop.f32.mrf.mxu0
      %v1137 = vadd.f32 0.0, %v1136
      %v1138 = vpop.f32.mrf.mxu0
      %v1139 = vpop.f32.mrf.mxu0
      %v1140 = vpop.f32.mrf.mxu0
      %1141 = vdwg.mxu0
      %1143 = vrot.lane.b32.xlu0 %v1137, 24
      %v1144 = vpop.permute.xlu0 %1143
      %vm1146 = vcmask 261312
      %1147 = vst.msk [vmem:[#allocation4] sm:$0xff] %vm1146, %v1144
      %s1148 = scalar_lea.vmem [#allocation3], 8
      %v1149 = vld [vmem:[%s1148] sm:$0xff]
      %v1150 = vpack.c.bf16 %v1149, %v1149
      %1152 = vrot.lane.b32.xlu0 %v1150, 96
      %v1153 = vpop.permute.xlu0 %1152
      %v1155 = vsel %vm687, %v1150, 0
      %v1158 = vsel %vm687, %v1153, 0
      %1160 = vmatprep.subr.bf16.mxu0 0
      %1161 = vmatpush1.bf16.xpose.msra.mxu0 0
      %1162 = vmatprep.subr.bf16.mxu0 0
      %1163 = vmatpush1.bf16.xpose.msra.mxu0 0
      %1164 = vmatprep.subr.bf16.mxu0 0
      %1165 = vmatpush1.bf16.xpose.msra.mxu0 0
      %1166 = vmatprep.subr.bf16.mxu0 0
      %1167 = vmatpush1.bf16.xpose.msra.mxu0 0
      %1168 = vmatprep.subr.bf16.mxu0 0
      %1169 = vmatpush1.bf16.xpose.msra.mxu0 0
      %1170 = vmatprep.subr.bf16.mxu0 0
      %1171 = vmatpush1.bf16.xpose.msra.mxu0 0
      %1172 = vmatprep.subr.bf16.mxu0 0
      %1173 = vmatpush1.bf16.xpose.msra.mxu0 0
      %1174 = vmatprep.subr.bf16.mxu0 0
      %1175 = vmatpush1.bf16.xpose.msra.mxu0 %v1158
      %1176 = vmatprep.subr.bf16.mxu0 0
      %1177 = vmatpush2.bf16.xpose.msra.mxu0 0
      %1178 = vmatprep.subr.bf16.mxu0 0
      %1179 = vmatpush2.bf16.xpose.msra.mxu0 0
      %1180 = vmatprep.subr.bf16.mxu0 0
      %1181 = vmatpush2.bf16.xpose.msra.mxu0 0
      %1182 = vmatprep.subr.bf16.mxu0 0
      %1183 = vmatpush2.bf16.xpose.msra.mxu0 0
      %1184 = vmatprep.subr.bf16.mxu0 0
      %1185 = vmatpush2.bf16.xpose.msra.mxu0 0
      %1186 = vmatprep.subr.bf16.mxu0 0
      %1187 = vmatpush2.bf16.xpose.msra.mxu0 0
      %1188 = vmatprep.subr.bf16.mxu0 0
      %1189 = vmatpush2.bf16.xpose.msra.mxu0 0
      %1190 = vmatprep.subr.bf16.mxu0 0
      %1191 = vmatpush2.bf16.xpose.msra.mxu0 0
      %1192 = vmatprep.mubr.bf16.mxu0 0
      %1193 = vmatmul.mubr.bf16.gmra.mxu0 %v1155
      %v1194 = vpop.f32.mrf.mxu0
      %v1195 = vadd.f32 0.0, %v1194
      %v1196 = vpop.f32.mrf.mxu0
      %v1197 = vpop.f32.mrf.mxu0
      %v1198 = vpop.f32.mrf.mxu0
      %1199 = vdwg.mxu0
      %v1200 = vmul.f32 %v1195, 0.35355338
      %v1201 = vsel %vm687, %v1200, -inf
      %1202 = vmax.xlane.f32.xlu0 %v1201
      %v1203 = vpop.xlane.xlu0 %1202
      %v1204 = vsub.f32 %v1200, %v1203
      %v1205 = vmul.f32 %v1204, 1.442695
      %v1206 = vpow.pop %v1205
      %v1207 = vsel %vm687, %v1206, 0.0
      %1208 = vadd.xlane.f32.xlu0 %v1207
      %v1209 = vpop.xlane.xlu0 %1208
      %v1210 = vrcp.pop %v1209
      %v1211 = vmul.f32 %v1206, %v1210
      %v1212 = vpack.c.bf16 %v1211, %v1211
      %1213 = vrot.lane.b32.xlu0 %v1150, 64
      %v1214 = vpop.permute.xlu0 %1213
      %v1216 = vsel %vm687, %v1212, 0
      %v1219 = vsel %vm752, %v1214, 0
      %1221 = vmatprep.subr.bf16.mxu0 0
      %1222 = vmatpush1.bf16.msra.mxu0 0
      %1223 = vmatprep.subr.bf16.mxu0 0
      %1224 = vmatpush1.bf16.msra.mxu0 0
      %1225 = vmatprep.subr.bf16.mxu0 0
      %1226 = vmatpush1.bf16.msra.mxu0 0
      %1227 = vmatprep.subr.bf16.mxu0 0
      %1228 = vmatpush1.bf16.msra.mxu0 0
      %1229 = vmatprep.subr.bf16.mxu0 0
      %1230 = vmatpush1.bf16.msra.mxu0 0
      %1231 = vmatprep.subr.bf16.mxu0 0
      %1232 = vmatpush1.bf16.msra.mxu0 0
      %1233 = vmatprep.subr.bf16.mxu0 0
      %1234 = vmatpush1.bf16.msra.mxu0 0
      %1235 = vmatprep.subr.bf16.mxu0 0
      %1236 = vmatpush1.bf16.msra.mxu0 %v1219
      %1237 = vmatprep.subr.bf16.mxu0 0
      %1238 = vmatpush2.bf16.msra.mxu0 0
      %1239 = vmatprep.subr.bf16.mxu0 0
      %1240 = vmatpush2.bf16.msra.mxu0 0
      %1241 = vmatprep.subr.bf16.mxu0 0
      %1242 = vmatpush2.bf16.msra.mxu0 0
      %1243 = vmatprep.subr.bf16.mxu0 0
      %1244 = vmatpush2.bf16.msra.mxu0 0
      %1245 = vmatprep.subr.bf16.mxu0 0
      %1246 = vmatpush2.bf16.msra.mxu0 0
      %1247 = vmatprep.subr.bf16.mxu0 0
      %1248 = vmatpush2.bf16.msra.mxu0 0
      %1249 = vmatprep.subr.bf16.mxu0 0
      %1250 = vmatpush2.bf16.msra.mxu0 0
      %1251 = vmatprep.subr.bf16.mxu0 0
      %1252 = vmatpush2.bf16.msra.mxu0 0
      %1253 = vmatprep.mubr.bf16.mxu0 0
      %1254 = vmatmul.mubr.bf16.gmra.mxu0 %v1216
      %v1255 = vpop.f32.mrf.mxu0
      %v1256 = vadd.f32 0.0, %v1255
      %v1257 = vpop.f32.mrf.mxu0
      %v1258 = vpop.f32.mrf.mxu0
      %v1259 = vpop.f32.mrf.mxu0
      %1260 = vdwg.mxu0
      %s1261 = scalar_lea.vmem [#allocation4], 8
      %1262 = vst.msk [vmem:[%s1261] sm:$0xff] %vm687, %v1256
      %1263 = vrot.lane.b32.xlu0 %v1150, 120
      %v1264 = vpop.permute.xlu0 %1263
      %1265 = vrot.lane.b32.xlu0 %v1150, 88
      %v1266 = vpop.permute.xlu0 %1265
      %v1268 = vsel %vm687, %v1264, 0
      %v1271 = vsel %vm687, %v1266, 0
      %1273 = vmatprep.subr.bf16.mxu0 0
      %1274 = vmatpush1.bf16.xpose.msra.mxu0 0
      %1275 = vmatprep.subr.bf16.mxu0 0
      %1276 = vmatpush1.bf16.xpose.msra.mxu0 0
      %1277 = vmatprep.subr.bf16.mxu0 0
      %1278 = vmatpush1.bf16.xpose.msra.mxu0 0
      %1279 = vmatprep.subr.bf16.mxu0 0
      %1280 = vmatpush1.bf16.xpose.msra.mxu0 0
      %1281 = vmatprep.subr.bf16.mxu0 0
      %1282 = vmatpush1.bf16.xpose.msra.mxu0 0
      %1283 = vmatprep.subr.bf16.mxu0 0
      %1284 = vmatpush1.bf16.xpose.msra.mxu0 0
      %1285 = vmatprep.subr.bf16.mxu0 0
      %1286 = vmatpush1.bf16.xpose.msra.mxu0 0
      %1287 = vmatprep.subr.bf16.mxu0 0
      %1288 = vmatpush1.bf16.xpose.msra.mxu0 %v1271
      %1289 = vmatprep.subr.bf16.mxu0 0
      %1290 = vmatpush2.bf16.xpose.msra.mxu0 0
      %1291 = vmatprep.subr.bf16.mxu0 0
      %1292 = vmatpush2.bf16.xpose.msra.mxu0 0
      %1293 = vmatprep.subr.bf16.mxu0 0
      %1294 = vmatpush2.bf16.xpose.msra.mxu0 0
      %1295 = vmatprep.subr.bf16.mxu0 0
      %1296 = vmatpush2.bf16.xpose.msra.mxu0 0
      %1297 = vmatprep.subr.bf16.mxu0 0
      %1298 = vmatpush2.bf16.xpose.msra.mxu0 0
      %1299 = vmatprep.subr.bf16.mxu0 0
      %1300 = vmatpush2.bf16.xpose.msra.mxu0 0
      %1301 = vmatprep.subr.bf16.mxu0 0
      %1302 = vmatpush2.bf16.xpose.msra.mxu0 0
      %1303 = vmatprep.subr.bf16.mxu0 0
      %1304 = vmatpush2.bf16.xpose.msra.mxu0 0
      %1305 = vmatprep.mubr.bf16.mxu0 0
      %1306 = vmatmul.mubr.bf16.gmra.mxu0 %v1268
      %v1307 = vpop.f32.mrf.mxu0
      %v1308 = vadd.f32 0.0, %v1307
      %v1309 = vpop.f32.mrf.mxu0
      %v1310 = vpop.f32.mrf.mxu0
      %v1311 = vpop.f32.mrf.mxu0
      %1312 = vdwg.mxu0
      %v1313 = vmul.f32 %v1308, 0.35355338
      %v1314 = vsel %vm687, %v1313, -inf
      %1315 = vmax.xlane.f32.xlu0 %v1314
      %v1316 = vpop.xlane.xlu0 %1315
      %v1317 = vsub.f32 %v1313, %v1316
      %v1318 = vmul.f32 %v1317, 1.442695
      %v1319 = vpow.pop %v1318
      %v1320 = vsel %vm687, %v1319, 0.0
      %1321 = vadd.xlane.f32.xlu0 %v1320
      %v1322 = vpop.xlane.xlu0 %1321
      %v1323 = vrcp.pop %v1322
      %v1324 = vmul.f32 %v1319, %v1323
      %v1325 = vpack.c.bf16 %v1324, %v1324
      %1326 = vrot.lane.b32.xlu0 %v1150, 56
      %v1327 = vpop.permute.xlu0 %1326
      %v1329 = vsel %vm687, %v1325, 0
      %v1332 = vsel %vm752, %v1327, 0
      %1334 = vmatprep.subr.bf16.mxu0 0
      %1335 = vmatpush1.bf16.msra.mxu0 0
      %1336 = vmatprep.subr.bf16.mxu0 0
      %1337 = vmatpush1.bf16.msra.mxu0 0
      %1338 = vmatprep.subr.bf16.mxu0 0
      %1339 = vmatpush1.bf16.msra.mxu0 0
      %1340 = vmatprep.subr.bf16.mxu0 0
      %1341 = vmatpush1.bf16.msra.mxu0 0
      %1342 = vmatprep.subr.bf16.mxu0 0
      %1343 = vmatpush1.bf16.msra.mxu0 0
      %1344 = vmatprep.subr.bf16.mxu0 0
      %1345 = vmatpush1.bf16.msra.mxu0 0
      %1346 = vmatprep.subr.bf16.mxu0 0
      %1347 = vmatpush1.bf16.msra.mxu0 0
      %1348 = vmatprep.subr.bf16.mxu0 0
      %1349 = vmatpush1.bf16.msra.mxu0 %v1332
      %1350 = vmatprep.subr.bf16.mxu0 0
      %1351 = vmatpush2.bf16.msra.mxu0 0
      %1352 = vmatprep.subr.bf16.mxu0 0
      %1353 = vmatpush2.bf16.msra.mxu0 0
      %1354 = vmatprep.subr.bf16.mxu0 0
      %1355 = vmatpush2.bf16.msra.mxu0 0
      %1356 = vmatprep.subr.bf16.mxu0 0
      %1357 = vmatpush2.bf16.msra.mxu0 0
      %1358 = vmatprep.subr.bf16.mxu0 0
      %1359 = vmatpush2.bf16.msra.mxu0 0
      %1360 = vmatprep.subr.bf16.mxu0 0
      %1361 = vmatpush2.bf16.msra.mxu0 0
      %1362 = vmatprep.subr.bf16.mxu0 0
      %1363 = vmatpush2.bf16.msra.mxu0 0
      %1364 = vmatprep.subr.bf16.mxu0 0
      %1365 = vmatpush2.bf16.msra.mxu0 0
      %1366 = vmatprep.mubr.bf16.mxu0 0
      %1367 = vmatmul.mubr.bf16.gmra.mxu0 %v1329
      %v1368 = vpop.f32.mrf.mxu0
      %v1369 = vadd.f32 0.0, %v1368
      %v1370 = vpop.f32.mrf.mxu0
      %v1371 = vpop.f32.mrf.mxu0
      %v1372 = vpop.f32.mrf.mxu0
      %1373 = vdwg.mxu0
      %1375 = vrot.lane.b32.xlu0 %v1369, 8
      %v1376 = vpop.permute.xlu0 %1375
      %1378 = vst.msk [vmem:[%s1261] sm:$0xff] %vm912, %v1376
      %1379 = vrot.lane.b32.xlu0 %v1150, 112
      %v1380 = vpop.permute.xlu0 %1379
      %1381 = vrot.lane.b32.xlu0 %v1150, 80
      %v1382 = vpop.permute.xlu0 %1381
      %v1384 = vsel %vm687, %v1380, 0
      %v1387 = vsel %vm687, %v1382, 0
      %1389 = vmatprep.subr.bf16.mxu0 0
      %1390 = vmatpush1.bf16.xpose.msra.mxu0 0
      %1391 = vmatprep.subr.bf16.mxu0 0
      %1392 = vmatpush1.bf16.xpose.msra.mxu0 0
      %1393 = vmatprep.subr.bf16.mxu0 0
      %1394 = vmatpush1.bf16.xpose.msra.mxu0 0
      %1395 = vmatprep.subr.bf16.mxu0 0
      %1396 = vmatpush1.bf16.xpose.msra.mxu0 0
      %1397 = vmatprep.subr.bf16.mxu0 0
      %1398 = vmatpush1.bf16.xpose.msra.mxu0 0
      %1399 = vmatprep.subr.bf16.mxu0 0
      %1400 = vmatpush1.bf16.xpose.msra.mxu0 0
      %1401 = vmatprep.subr.bf16.mxu0 0
      %1402 = vmatpush1.bf16.xpose.msra.mxu0 0
      %1403 = vmatprep.subr.bf16.mxu0 0
      %1404 = vmatpush1.bf16.xpose.msra.mxu0 %v1387
      %1405 = vmatprep.subr.bf16.mxu0 0
      %1406 = vmatpush2.bf16.xpose.msra.mxu0 0
      %1407 = vmatprep.subr.bf16.mxu0 0
      %1408 = vmatpush2.bf16.xpose.msra.mxu0 0
      %1409 = vmatprep.subr.bf16.mxu0 0
      %1410 = vmatpush2.bf16.xpose.msra.mxu0 0
      %1411 = vmatprep.subr.bf16.mxu0 0
      %1412 = vmatpush2.bf16.xpose.msra.mxu0 0
      %1413 = vmatprep.subr.bf16.mxu0 0
      %1414 = vmatpush2.bf16.xpose.msra.mxu0 0
      %1415 = vmatprep.subr.bf16.mxu0 0
      %1416 = vmatpush2.bf16.xpose.msra.mxu0 0
      %1417 = vmatprep.subr.bf16.mxu0 0
      %1418 = vmatpush2.bf16.xpose.msra.mxu0 0
      %1419 = vmatprep.subr.bf16.mxu0 0
      %1420 = vmatpush2.bf16.xpose.msra.mxu0 0
      %1421 = vmatprep.mubr.bf16.mxu0 0
      %1422 = vmatmul.mubr.bf16.gmra.mxu0 %v1384
      %v1423 = vpop.f32.mrf.mxu0
      %v1424 = vadd.f32 0.0, %v1423
      %v1425 = vpop.f32.mrf.mxu0
      %v1426 = vpop.f32.mrf.mxu0
      %v1427 = vpop.f32.mrf.mxu0
      %1428 = vdwg.mxu0
      %v1429 = vmul.f32 %v1424, 0.35355338
      %v1430 = vsel %vm687, %v1429, -inf
      %1431 = vmax.xlane.f32.xlu0 %v1430
      %v1432 = vpop.xlane.xlu0 %1431
      %v1433 = vsub.f32 %v1429, %v1432
      %v1434 = vmul.f32 %v1433, 1.442695
      %v1435 = vpow.pop %v1434
      %v1436 = vsel %vm687, %v1435, 0.0
      %1437 = vadd.xlane.f32.xlu0 %v1436
      %v1438 = vpop.xlane.xlu0 %1437
      %v1439 = vrcp.pop %v1438
      %v1440 = vmul.f32 %v1435, %v1439
      %v1441 = vpack.c.bf16 %v1440, %v1440
      %1442 = vrot.lane.b32.xlu0 %v1150, 48
      %v1443 = vpop.permute.xlu0 %1442
      %v1445 = vsel %vm687, %v1441, 0
      %v1448 = vsel %vm752, %v1443, 0
      %1450 = vmatprep.subr.bf16.mxu0 0
      %1451 = vmatpush1.bf16.msra.mxu0 0
      %1452 = vmatprep.subr.bf16.mxu0 0
      %1453 = vmatpush1.bf16.msra.mxu0 0
      %1454 = vmatprep.subr.bf16.mxu0 0
      %1455 = vmatpush1.bf16.msra.mxu0 0
      %1456 = vmatprep.subr.bf16.mxu0 0
      %1457 = vmatpush1.bf16.msra.mxu0 0
      %1458 = vmatprep.subr.bf16.mxu0 0
      %1459 = vmatpush1.bf16.msra.mxu0 0
      %1460 = vmatprep.subr.bf16.mxu0 0
      %1461 = vmatpush1.bf16.msra.mxu0 0
      %1462 = vmatprep.subr.bf16.mxu0 0
      %1463 = vmatpush1.bf16.msra.mxu0 0
      %1464 = vmatprep.subr.bf16.mxu0 0
      %1465 = vmatpush1.bf16.msra.mxu0 %v1448
      %1466 = vmatprep.subr.bf16.mxu0 0
      %1467 = vmatpush2.bf16.msra.mxu0 0
      %1468 = vmatprep.subr.bf16.mxu0 0
      %1469 = vmatpush2.bf16.msra.mxu0 0
      %1470 = vmatprep.subr.bf16.mxu0 0
      %1471 = vmatpush2.bf16.msra.mxu0 0
      %1472 = vmatprep.subr.bf16.mxu0 0
      %1473 = vmatpush2.bf16.msra.mxu0 0
      %1474 = vmatprep.subr.bf16.mxu0 0
      %1475 = vmatpush2.bf16.msra.mxu0 0
      %1476 = vmatprep.subr.bf16.mxu0 0
      %1477 = vmatpush2.bf16.msra.mxu0 0
      %1478 = vmatprep.subr.bf16.mxu0 0
      %1479 = vmatpush2.bf16.msra.mxu0 0
      %1480 = vmatprep.subr.bf16.mxu0 0
      %1481 = vmatpush2.bf16.msra.mxu0 0
      %1482 = vmatprep.mubr.bf16.mxu0 0
      %1483 = vmatmul.mubr.bf16.gmra.mxu0 %v1445
      %v1484 = vpop.f32.mrf.mxu0
      %v1485 = vadd.f32 0.0, %v1484
      %v1486 = vpop.f32.mrf.mxu0
      %v1487 = vpop.f32.mrf.mxu0
      %v1488 = vpop.f32.mrf.mxu0
      %1489 = vdwg.mxu0
      %1491 = vrot.lane.b32.xlu0 %v1485, 16
      %v1492 = vpop.permute.xlu0 %1491
      %1494 = vst.msk [vmem:[%s1261] sm:$0xff] %vm1029, %v1492
      %1495 = vrot.lane.b32.xlu0 %v1150, 104
      %v1496 = vpop.permute.xlu0 %1495
      %1497 = vrot.lane.b32.xlu0 %v1150, 72
      %v1498 = vpop.permute.xlu0 %1497
      %v1500 = vsel %vm687, %v1496, 0
      %v1503 = vsel %vm687, %v1498, 0
      %1505 = vmatprep.subr.bf16.mxu0 0
      %1506 = vmatpush1.bf16.xpose.msra.mxu0 0
      %1507 = vmatprep.subr.bf16.mxu0 0
      %1508 = vmatpush1.bf16.xpose.msra.mxu0 0
      %1509 = vmatprep.subr.bf16.mxu0 0
      %1510 = vmatpush1.bf16.xpose.msra.mxu0 0
      %1511 = vmatprep.subr.bf16.mxu0 0
      %1512 = vmatpush1.bf16.xpose.msra.mxu0 0
      %1513 = vmatprep.subr.bf16.mxu0 0
      %1514 = vmatpush1.bf16.xpose.msra.mxu0 0
      %1515 = vmatprep.subr.bf16.mxu0 0
      %1516 = vmatpush1.bf16.xpose.msra.mxu0 0
      %1517 = vmatprep.subr.bf16.mxu0 0
      %1518 = vmatpush1.bf16.xpose.msra.mxu0 0
      %1519 = vmatprep.subr.bf16.mxu0 0
      %1520 = vmatpush1.bf16.xpose.msra.mxu0 %v1503
      %1521 = vmatprep.subr.bf16.mxu0 0
      %1522 = vmatpush2.bf16.xpose.msra.mxu0 0
      %1523 = vmatprep.subr.bf16.mxu0 0
      %1524 = vmatpush2.bf16.xpose.msra.mxu0 0
      %1525 = vmatprep.subr.bf16.mxu0 0
      %1526 = vmatpush2.bf16.xpose.msra.mxu0 0
      %1527 = vmatprep.subr.bf16.mxu0 0
      %1528 = vmatpush2.bf16.xpose.msra.mxu0 0
      %1529 = vmatprep.subr.bf16.mxu0 0
      %1530 = vmatpush2.bf16.xpose.msra.mxu0 0
      %1531 = vmatprep.subr.bf16.mxu0 0
      %1532 = vmatpush2.bf16.xpose.msra.mxu0 0
      %1533 = vmatprep.subr.bf16.mxu0 0
      %1534 = vmatpush2.bf16.xpose.msra.mxu0 0
      %1535 = vmatprep.subr.bf16.mxu0 0
      %1536 = vmatpush2.bf16.xpose.msra.mxu0 0
      %1537 = vmatprep.mubr.bf16.mxu0 0
      %1538 = vmatmul.mubr.bf16.gmra.mxu0 %v1500
      %v1539 = vpop.f32.mrf.mxu0
      %v1540 = vadd.f32 0.0, %v1539
      %v1541 = vpop.f32.mrf.mxu0
      %v1542 = vpop.f32.mrf.mxu0
      %v1543 = vpop.f32.mrf.mxu0
      %1544 = vdwg.mxu0
      %v1545 = vmul.f32 %v1540, 0.35355338
      %v1546 = vsel %vm687, %v1545, -inf
      %1547 = vmax.xlane.f32.xlu0 %v1546
      %v1548 = vpop.xlane.xlu0 %1547
      %v1549 = vsub.f32 %v1545, %v1548
      %v1550 = vmul.f32 %v1549, 1.442695
      %v1551 = vpow.pop %v1550
      %v1552 = vsel %vm687, %v1551, 0.0
      %1553 = vadd.xlane.f32.xlu0 %v1552
      %v1554 = vpop.xlane.xlu0 %1553
      %v1555 = vrcp.pop %v1554
      %v1556 = vmul.f32 %v1551, %v1555
      %v1557 = vpack.c.bf16 %v1556, %v1556
      %1558 = vrot.lane.b32.xlu0 %v1150, 40
      %v1559 = vpop.permute.xlu0 %1558
      %v1561 = vsel %vm687, %v1557, 0
      %v1564 = vsel %vm752, %v1559, 0
      %1566 = vmatprep.subr.bf16.mxu0 0
      %1567 = vmatpush1.bf16.msra.mxu0 0
      %1568 = vmatprep.subr.bf16.mxu0 0
      %1569 = vmatpush1.bf16.msra.mxu0 0
      %1570 = vmatprep.subr.bf16.mxu0 0
      %1571 = vmatpush1.bf16.msra.mxu0 0
      %1572 = vmatprep.subr.bf16.mxu0 0
      %1573 = vmatpush1.bf16.msra.mxu0 0
      %1574 = vmatprep.subr.bf16.mxu0 0
      %1575 = vmatpush1.bf16.msra.mxu0 0
      %1576 = vmatprep.subr.bf16.mxu0 0
      %1577 = vmatpush1.bf16.msra.mxu0 0
      %1578 = vmatprep.subr.bf16.mxu0 0
      %1579 = vmatpush1.bf16.msra.mxu0 0
      %1580 = vmatprep.subr.bf16.mxu0 0
      %1581 = vmatpush1.bf16.msra.mxu0 %v1564
      %1582 = vmatprep.subr.bf16.mxu0 0
      %1583 = vmatpush2.bf16.msra.mxu0 0
      %1584 = vmatprep.subr.bf16.mxu0 0
      %1585 = vmatpush2.bf16.msra.mxu0 0
      %1586 = vmatprep.subr.bf16.mxu0 0
      %1587 = vmatpush2.bf16.msra.mxu0 0
      %1588 = vmatprep.subr.bf16.mxu0 0
      %1589 = vmatpush2.bf16.msra.mxu0 0
      %1590 = vmatprep.subr.bf16.mxu0 0
      %1591 = vmatpush2.bf16.msra.mxu0 0
      %1592 = vmatprep.subr.bf16.mxu0 0
      %1593 = vmatpush2.bf16.msra.mxu0 0
      %1594 = vmatprep.subr.bf16.mxu0 0
      %1595 = vmatpush2.bf16.msra.mxu0 0
      %1596 = vmatprep.subr.bf16.mxu0 0
      %1597 = vmatpush2.bf16.msra.mxu0 0
      %1598 = vmatprep.mubr.bf16.mxu0 0
      %1599 = vmatmul.mubr.bf16.gmra.mxu0 %v1561
      %v1600 = vpop.f32.mrf.mxu0
      %v1601 = vadd.f32 0.0, %v1600
      %v1602 = vpop.f32.mrf.mxu0
      %v1603 = vpop.f32.mrf.mxu0
      %v1604 = vpop.f32.mrf.mxu0
      %1605 = vdwg.mxu0
      %1607 = vrot.lane.b32.xlu0 %v1601, 24
      %v1608 = vpop.permute.xlu0 %1607
      %1610 = vst.msk [vmem:[%s1261] sm:$0xff] %vm1146, %v1608
      %v1611 = vld [vmem:[#allocation4] sm:$0xff]
      %v1612 = vld [vmem:[#allocation4 + $0x8] sm:$0xff]
      %v1613 = vpack.c.bf16 %v1612, %v1611
      %v1614 = vld [vmem:[%s566] sm:$0xf]
      %v1615 = vld [vmem:[%s566 + $0x4] sm:$0xf]
      %v1616 = vld [vmem:[%s566 + $0x8] sm:$0xf]
      %v1617 = vld [vmem:[%s566 + $0xc] sm:$0xf]
      %v1618 = vld [vmem:[%s569] sm:$0x1]
      %v1620 = vlaneseq
      %v1621 = vshrl.u32 %v1620, 7
      %v1622 = vsub.s32 0, %v1621
      %v1623 = vrot.slane %v1618, %v1622
      %v1629 = vunpack.c.l.b16 %v1614
      %v1630 = vunpack.c.l.b16 %v1615
      %v1631 = vunpack.c.l.b16 %v1616
      %v1632 = vunpack.c.l.b16 %v1617
      %v1633 = vpack.c.b16 %v1630, %v1629
      %v1634 = vpack.c.b16 %v1632, %v1631
      %v1638 = vsel %vm634, %v1613, 0
      %1640 = vmatprep.subr.bf16.mxu0 0
      %1641 = vmatpush1.bf16.msra.mxu0 0
      %1642 = vmatprep.subr.bf16.mxu0 0
      %1643 = vmatpush1.bf16.msra.mxu0 0
      %1644 = vmatprep.subr.bf16.mxu0 0
      %1645 = vmatpush1.bf16.msra.mxu0 0
      %1646 = vmatprep.subr.bf16.mxu0 0
      %1647 = vmatpush1.bf16.msra.mxu0 0
      %1648 = vmatprep.subr.bf16.mxu0 0
      %1649 = vmatpush1.bf16.msra.mxu0 0
      %1650 = vmatprep.subr.bf16.mxu0 0
      %1651 = vmatpush1.bf16.msra.mxu0 0
      %1652 = vmatprep.subr.bf16.mxu0 0
      %1653 = vmatpush1.bf16.msra.mxu0 %v1634
      %1654 = vmatprep.subr.bf16.mxu0 0
      %1655 = vmatpush1.bf16.msra.mxu0 %v1633
      %1656 = vmatprep.subr.bf16.mxu0 0
      %1657 = vmatpush2.bf16.msra.mxu0 0
      %1658 = vmatprep.subr.bf16.mxu0 0
      %1659 = vmatpush2.bf16.msra.mxu0 0
      %1660 = vmatprep.subr.bf16.mxu0 0
      %1661 = vmatpush2.bf16.msra.mxu0 0
      %1662 = vmatprep.subr.bf16.mxu0 0
      %1663 = vmatpush2.bf16.msra.mxu0 0
      %1664 = vmatprep.subr.bf16.mxu0 0
      %1665 = vmatpush2.bf16.msra.mxu0 0
      %1666 = vmatprep.subr.bf16.mxu0 0
      %1667 = vmatpush2.bf16.msra.mxu0 0
      %1668 = vmatprep.subr.bf16.mxu0 0
      %1669 = vmatpush2.bf16.msra.mxu0 0
      %1670 = vmatprep.subr.bf16.mxu0 0
      %1671 = vmatpush2.bf16.msra.mxu0 0
      %1672 = vmatprep.mubr.bf16.mxu0 0
      %1673 = vmatmul.mubr.bf16.gmra.mxu0 %v1638
      %v1674 = vpop.f32.mrf.mxu0
      %v1675 = vadd.f32 %v1623, %v1674
      %v1676 = vpop.f32.mrf.mxu0
      %v1677 = vpop.f32.mrf.mxu0
      %v1678 = vadd.f32 %v1623, %v1677
      %v1679 = vpop.f32.mrf.mxu0
      %1680 = vdwg.mxu0
      %v1681 = vadd.f32 %v608, %v1675
      %v1682 = vadd.f32 %v609, %v1678
      %v1683 = vld [vmem:[%s572] sm:$0x1]
      %v1684 = vld [vmem:[%s575] sm:$0x1]
      %v1685 = vsel %vm634, %v1681, 0.0
      %1686 = vadd.xlane.f32.xlu0 %v1685
      %v1687 = vpop.xlane.xlu0 %1686
      %v1688 = vsel %vm634, %v1682, 0.0
      %1689 = vadd.xlane.f32.xlu0 %v1688
      %v1690 = vpop.xlane.xlu0 %1689
      %v1691 = vrcp.pop 32.0
      %v1692 = vmul.f32 %v1687, %v1691
      %v1693 = vmul.f32 %v1690, %v1691
      %v1694 = vsub.f32 %v1681, %v1692
      %v1695 = vsub.f32 %v1682, %v1693
      %v1696 = vmul.f32 %v1694, %v1694
      %v1697 = vmul.f32 %v1695, %v1695
      %v1698 = vsel %vm634, %v1696, 0.0
      %1699 = vadd.xlane.f32.xlu0 %v1698
      %v1700 = vpop.xlane.xlu0 %1699
      %v1701 = vsel %vm634, %v1697, 0.0
      %1702 = vadd.xlane.f32.xlu0 %v1701
      %v1703 = vpop.xlane.xlu0 %1702
      %v1704 = vmul.f32 %v1700, %v1691
      %v1705 = vmul.f32 %v1703, %v1691
      %v1706 = vadd.f32 %v1704, 1e-05
      %v1707 = vadd.f32 %v1705, 1e-05
      %v1708 = vrsqrt.pop %v1706
      %v1709 = vrsqrt.pop %v1707
      %v1710 = vmul.f32 %v1694, %v1708
      %v1711 = vmul.f32 %v1695, %v1709
      %v1713 = vlaneseq
      %v1714 = vshrl.u32 %v1713, 7
      %v1715 = vsub.s32 0, %v1714
      %v1716 = vrot.slane %v1683, %v1715
      %v1718 = vmul.f32 %v1710, %v1716
      %v1719 = vmul.f32 %v1711, %v1716
      %v1721 = vlaneseq
      %v1722 = vshrl.u32 %v1721, 7
      %v1723 = vsub.s32 0, %v1722
      %v1724 = vrot.slane %v1684, %v1723
      %v1726 = vadd.f32 %v1718, %v1724
      %v1727 = vadd.f32 %v1719, %v1724
      %v1728 = vpack.c.bf16 %v1727, %v1726
      %v1729 = vld [vmem:[%s580] sm:$0xf]
      %v1730 = vld [vmem:[%s580 + $0x4] sm:$0xf]
      %v1731 = vld [vmem:[%s580 + $0x8] sm:$0xf]
      %v1732 = vld [vmem:[%s580 + $0xc] sm:$0xf]
      %v1733 = vld [vmem:[%s583] sm:$0x1]
      %v1735 = vlaneseq
      %v1736 = vshrl.u32 %v1735, 7
      %v1737 = vsub.s32 0, %v1736
      %v1738 = vrot.slane %v1733, %v1737
      %v1744 = vunpack.c.l.b16 %v1729
      %v1745 = vunpack.c.l.b16 %v1730
      %v1746 = vunpack.c.l.b16 %v1731
      %v1747 = vunpack.c.l.b16 %v1732
      %v1748 = vpack.c.b16 %v1745, %v1744
      %v1749 = vpack.c.b16 %v1747, %v1746
      %v1753 = vsel %vm634, %v1728, 0
      %1755 = vmatprep.subr.bf16.mxu0 0
      %1756 = vmatpush1.bf16.msra.mxu0 0
      %1757 = vmatprep.subr.bf16.mxu0 0
      %1758 = vmatpush1.bf16.msra.mxu0 0
      %1759 = vmatprep.subr.bf16.mxu0 0
      %1760 = vmatpush1.bf16.msra.mxu0 0
      %1761 = vmatprep.subr.bf16.mxu0 0
      %1762 = vmatpush1.bf16.msra.mxu0 0
      %1763 = vmatprep.subr.bf16.mxu0 0
      %1764 = vmatpush1.bf16.msra.mxu0 0
      %1765 = vmatprep.subr.bf16.mxu0 0
      %1766 = vmatpush1.bf16.msra.mxu0 0
      %1767 = vmatprep.subr.bf16.mxu0 0
      %1768 = vmatpush1.bf16.msra.mxu0 %v1749
      %1769 = vmatprep.subr.bf16.mxu0 0
      %1770 = vmatpush1.bf16.msra.mxu0 %v1748
      %1771 = vmatprep.subr.bf16.mxu0 0
      %1772 = vmatpush2.bf16.msra.mxu0 0
      %1773 = vmatprep.subr.bf16.mxu0 0
      %1774 = vmatpush2.bf16.msra.mxu0 0
      %1775 = vmatprep.subr.bf16.mxu0 0
      %1776 = vmatpush2.bf16.msra.mxu0 0
      %1777 = vmatprep.subr.bf16.mxu0 0
      %1778 = vmatpush2.bf16.msra.mxu0 0
      %1779 = vmatprep.subr.bf16.mxu0 0
      %1780 = vmatpush2.bf16.msra.mxu0 0
      %1781 = vmatprep.subr.bf16.mxu0 0
      %1782 = vmatpush2.bf16.msra.mxu0 0
      %1783 = vmatprep.subr.bf16.mxu0 0
      %1784 = vmatpush2.bf16.msra.mxu0 0
      %1785 = vmatprep.subr.bf16.mxu0 0
      %1786 = vmatpush2.bf16.msra.mxu0 0
      %1787 = vmatprep.mubr.bf16.mxu0 0
      %1788 = vmatmul.mubr.bf16.gmra.mxu0 %v1753
      %v1789 = vpop.f32.mrf.mxu0
      %v1790 = vadd.f32 %v1738, %v1789
      %v1791 = vpop.f32.mrf.mxu0
      %v1792 = vpop.f32.mrf.mxu0
      %v1793 = vadd.f32 %v1738, %v1792
      %v1794 = vpop.f32.mrf.mxu0
      %1795 = vdwg.mxu0
      %v1796 = vmax.f32 %v1790, 0.0
      %v1797 = vmax.f32 %v1793, 0.0
      %v1798 = vpack.c.bf16 %v1797, %v1796
      %v1799 = vld [vmem:[%s588] sm:$0xf]
      %v1800 = vld [vmem:[%s588 + $0x4] sm:$0xf]
      %v1801 = vld [vmem:[%s588 + $0x8] sm:$0xf]
      %v1802 = vld [vmem:[%s588 + $0xc] sm:$0xf]
      %v1803 = vld [vmem:[%s588 + $0x10] sm:$0xf]
      %v1804 = vld [vmem:[%s588 + $0x14] sm:$0xf]
      %v1805 = vld [vmem:[%s588 + $0x18] sm:$0xf]
      %v1806 = vld [vmem:[%s588 + $0x1c] sm:$0xf]
      %v1807 = vld [vmem:[%s591] sm:$0x1]
      %v1809 = vlaneseq
      %v1810 = vshrl.u32 %v1809, 7
      %v1811 = vsub.s32 0, %v1810
      %v1812 = vrot.slane %v1807, %v1811
      %v1822 = vunpack.c.l.b16 %v1799
      %v1823 = vunpack.c.l.b16 %v1800
      %v1824 = vunpack.c.l.b16 %v1801
      %v1825 = vunpack.c.l.b16 %v1802
      %v1826 = vunpack.c.l.b16 %v1803
      %v1827 = vunpack.c.l.b16 %v1804
      %v1828 = vunpack.c.l.b16 %v1805
      %v1829 = vunpack.c.l.b16 %v1806
      %v1830 = vpack.c.b16 %v1823, %v1822
      %v1831 = vpack.c.b16 %v1825, %v1824
      %v1832 = vpack.c.b16 %v1827, %v1826
      %v1833 = vpack.c.b16 %v1829, %v1828
      %vm1838 = vcmask 523264
      %v1840 = vsel %vm1838, %v1798, 0
      %1842 = vmatprep.subr.bf16.mxu0 0
      %1843 = vmatpush1.bf16.msra.mxu0 0
      %1844 = vmatprep.subr.bf16.mxu0 0
      %1845 = vmatpush1.bf16.msra.mxu0 0
      %1846 = vmatprep.subr.bf16.mxu0 0
      %1847 = vmatpush1.bf16.msra.mxu0 0
      %1848 = vmatprep.subr.bf16.mxu0 0
      %1849 = vmatpush1.bf16.msra.mxu0 0
      %1850 = vmatprep.subr.bf16.mxu0 0
      %1851 = vmatpush1.bf16.msra.mxu0 %v1833
      %1852 = vmatprep.subr.bf16.mxu0 0
      %1853 = vmatpush1.bf16.msra.mxu0 %v1832
      %1854 = vmatprep.subr.bf16.mxu0 0
      %1855 = vmatpush1.bf16.msra.mxu0 %v1831
      %1856 = vmatprep.subr.bf16.mxu0 0
      %1857 = vmatpush1.bf16.msra.mxu0 %v1830
      %1858 = vmatprep.subr.bf16.mxu0 0
      %1859 = vmatpush2.bf16.msra.mxu0 0
      %1860 = vmatprep.subr.bf16.mxu0 0
      %1861 = vmatpush2.bf16.msra.mxu0 0
      %1862 = vmatprep.subr.bf16.mxu0 0
      %1863 = vmatpush2.bf16.msra.mxu0 0
      %1864 = vmatprep.subr.bf16.mxu0 0
      %1865 = vmatpush2.bf16.msra.mxu0 0
      %1866 = vmatprep.subr.bf16.mxu0 0
      %1867 = vmatpush2.bf16.msra.mxu0 0
      %1868 = vmatprep.subr.bf16.mxu0 0
      %1869 = vmatpush2.bf16.msra.mxu0 0
      %1870 = vmatprep.subr.bf16.mxu0 0
      %1871 = vmatpush2.bf16.msra.mxu0 0
      %1872 = vmatprep.subr.bf16.mxu0 0
      %1873 = vmatpush2.bf16.msra.mxu0 0
      %1874 = vmatprep.mubr.bf16.mxu0 0
      %1875 = vmatmul.mubr.bf16.gmra.mxu0 %v1840
      %v1876 = vpop.f32.mrf.mxu0
      %v1877 = vadd.f32 %v1812, %v1876
      %v1878 = vpop.f32.mrf.mxu0
      %v1879 = vpop.f32.mrf.mxu0
      %v1880 = vadd.f32 %v1812, %v1879
      %v1881 = vpop.f32.mrf.mxu0
      %1882 = vdwg.mxu0
      %v1883 = vadd.f32 %v1726, %v1877
      %v1884 = vadd.f32 %v1727, %v1880
      %v1885 = vld [vmem:[%s594] sm:$0x1]
      %v1886 = vld [vmem:[%s597] sm:$0x1]
      %v1887 = vsel %vm634, %v1883, 0.0
      %1888 = vadd.xlane.f32.xlu0 %v1887
      %v1889 = vpop.xlane.xlu0 %1888
      %v1890 = vsel %vm634, %v1884, 0.0
      %1891 = vadd.xlane.f32.xlu0 %v1890
      %v1892 = vpop.xlane.xlu0 %1891
      %v1893 = vmul.f32 %v1889, %v1691
      %v1894 = vmul.f32 %v1892, %v1691
      %v1895 = vsub.f32 %v1883, %v1893
      %v1896 = vsub.f32 %v1884, %v1894
      %v1897 = vmul.f32 %v1895, %v1895
      %v1898 = vmul.f32 %v1896, %v1896
      %v1899 = vsel %vm634, %v1897, 0.0
      %1900 = vadd.xlane.f32.xlu0 %v1899
      %v1901 = vpop.xlane.xlu0 %1900
      %v1902 = vsel %vm634, %v1898, 0.0
      %1903 = vadd.xlane.f32.xlu0 %v1902
      %v1904 = vpop.xlane.xlu0 %1903
      %v1905 = vmul.f32 %v1901, %v1691
      %v1906 = vmul.f32 %v1904, %v1691
      %v1907 = vadd.f32 %v1905, 1e-05
      %v1908 = vadd.f32 %v1906, 1e-05
      %v1909 = vrsqrt.pop %v1907
      %v1910 = vrsqrt.pop %v1908
      %v1911 = vmul.f32 %v1895, %v1909
      %v1912 = vmul.f32 %v1896, %v1910
      %v1914 = vlaneseq
      %v1915 = vshrl.u32 %v1914, 7
      %v1916 = vsub.s32 0, %v1915
      %v1917 = vrot.slane %v1885, %v1916
      %v1919 = vmul.f32 %v1911, %v1917
      %v1920 = vmul.f32 %v1912, %v1917
      %v1922 = vlaneseq
      %v1923 = vshrl.u32 %v1922, 7
      %v1924 = vsub.s32 0, %v1923
      %v1925 = vrot.slane %v1886, %v1924
      %v1927 = vadd.f32 %v1919, %v1925
      %v1928 = vadd.f32 %v1920, %v1925
      %1929 = vst.msk [vmem:[#allocation2] sm:$0xff] %vm634, %v1927
      %1930 = vst.msk [vmem:[#allocation2 + $0x8] sm:$0xff] %vm634, %v1928
      %1931 = vst.msk [vmem:[%s13] sm:$0xff] %vm634, %v1927
      %1932 = vst.msk [vmem:[%s13 + $0x8] sm:$0xff] %vm634, %v1928
      // Predicated region
      $region77: #{transformer_encoder.1} parent=71 // pred_check
        %p1933 = pneg %p370
      $region78: #{transformer_encoder.1} parent=71 // pred_check_branch
        %1935 = sbr.rel (%p1933) target = $region80
      $region79: #{transformer_encoder.1} parent=71 // pred_region
        _
      $region80: #{transformer_encoder.1} parent=71 // pred_fallthru
        _
      // Predicated region
      $region81: #{transformer_encoder.1} parent=71 // pred_check
        %p1936 = pneg %p370
      $region82: #{transformer_encoder.1} parent=71 // pred_check_branch
        %1938 = sbr.rel (%p1936) target = $region84
      $region83: #{transformer_encoder.1} parent=71 // pred_region
        _
      $region84: #{transformer_encoder.1} parent=71 // pred_fallthru
        _
    $region72: #{transformer_encoder.1} parent=5 // pred_fallthru
      _
    %p1939 = scmp.le.s32.totalorder 2, %s19
    // Predicated region
    $region85: #{transformer_encoder.1} parent=5 // pred_check
      %p1940 = pneg %p1939
    $region86: #{transformer_encoder.1} parent=5 // pred_check_branch
      %1942 = sbr.rel (%p1940) target = $region88
    $region87: #{transformer_encoder.1} parent=5 // pred_region
      %s1943 = ssub.s32 %s19, 2
    $region88: #{transformer_encoder.1} parent=5 // pred_fallthru
      _
  $region6: #{transformer_encoder.1} parent=0 // loop_footer
    %s23 = sadd.s32 1, %s19
  $region7: #{transformer_encoder.1} parent=0 // loop_footer_branch
    %18 = sbr.rel target = $region3
  $region8: #{transformer_encoder.1} parent=0 // loop_exit
    _

</llo_original>
